<compile_context>
chip_gen: v6e
topology: v6e:2x2x1
jax: 0.10.0
libtpu: 0.0.40
codegen_flags: <defaults>
</compile_context>

<pallas_src>
import functools

import jax
import jax.numpy as jnp
from jax.experimental import pallas as pl
from jax.experimental.pallas import tpu as pltpu

# Module hyper-parameters (Block(dim=DIM); Attention default num_heads=12;
# MLP hidden_feature = 4 * mlp_hidden_ratio = 16, independent of dim — module quirk).
DIM = 48
DIM_PAD = 128                         # zero-padded lane width (one full vreg of lanes)
NUM_HEADS = 12
HEAD_DIM = DIM // NUM_HEADS           # 4
MLP_HIDDEN = 4 * 4                    # 16
LN_EPS = 1e-5

# ---- packed parameter slab layout (row offsets; width = SLAB_COLS) ----
SLAB_COLS = 3 * DIM                   # 144
R_WQKV = 0                            # (128, 144)  fused QKV weight (rows >= 48 are zero)
R_BQKV = R_WQKV + DIM_PAD             # 128         (1, 144) fused QKV bias
R_LN1G = 129
R_LN1B = 130
R_LN2G = 131
R_LN2B = 132
R_BPROJ = 133
R_BFC2 = 134
R_BFC1 = 135
R_MASK = 136                          # (1, 128) lane mask: 1 on the 48 real lanes
R_WPROJ = 144                         # (48, 128)  proj weight  (cols >= 48 are zero)
R_WFC1 = R_WPROJ + DIM                # 192  (128, 16) fc1 weight (rows >= 48 are zero)
R_WFC2 = R_WFC1 + DIM_PAD             # 320  (16, 128) fc2 weight (cols >= 48 are zero)
R_M = R_WFC2 + MLP_HIDDEN             # 336  (48, 12)  lane -> head membership
R_MT = R_M + DIM                      # 384  (12, 48)  head -> lane membership
SLAB_ROWS = 400                       # 396 rounded up to a multiple of 8


def block_kernel(bb, p_tokens, x_ref, p_ref, o_ref):
    P = p_tokens
    D, DP, H = DIM, DIM_PAD, NUM_HEADS
    N = bb * P

    x = x_ref[...]                                         # (N, 128) f32, padded lanes are 0

    # --- static slices of the packed parameter slab (compile-time offsets) ---
    wqkv = p_ref[R_WQKV:R_WQKV + DP, :]                    # (128, 144)
    bqkv = p_ref[R_BQKV:R_BQKV + 1, :]                     # (1, 144)
    ln1_g = p_ref[R_LN1G:R_LN1G + 1, :DP]
    ln1_b = p_ref[R_LN1B:R_LN1B + 1, :DP]
    ln2_g = p_ref[R_LN2G:R_LN2G + 1, :DP]
    ln2_b = p_ref[R_LN2B:R_LN2B + 1, :DP]
    bproj = p_ref[R_BPROJ:R_BPROJ + 1, :DP]
    bfc2 = p_ref[R_BFC2:R_BFC2 + 1, :DP]
    bfc1 = p_ref[R_BFC1:R_BFC1 + 1, :MLP_HIDDEN]
    mask = p_ref[R_MASK:R_MASK + 1, :DP]                   # (1, 128)
    wproj = p_ref[R_WPROJ:R_WPROJ + D, :DP]                # (48, 128)
    wfc1 = p_ref[R_WFC1:R_WFC1 + DP, :MLP_HIDDEN]          # (128, 16)
    wfc2 = p_ref[R_WFC2:R_WFC2 + MLP_HIDDEN, :DP]          # (16, 128)
    m = p_ref[R_M:R_M + D, :H]                             # (48, 12)
    mt = p_ref[R_MT:R_MT + H, :D]                          # (12, 48)

    inv_d = 1.0 / D

    def layernorm(y, g, b):
        # Padded lanes of y are exactly zero, so full-lane sums equal sums over the D real lanes.
        mu = jnp.sum(y, axis=-1, keepdims=True) * inv_d
        c = (y - mu) * mask                                # re-zero the padded lanes
        var = jnp.sum(c * c, axis=-1, keepdims=True) * inv_d
        return c * jax.lax.rsqrt(var + LN_EPS) * g + b     # padded lanes stay 0 (b is 0 there)

    # ---------------- Attention branch ----------------
    xn = layernorm(x, ln1_g, ln1_b)
    # Single fused QKV matmul; columns are head-major and the qk scale is folded into Q.
    qkv = jnp.dot(xn, wqkv, preferred_element_type=jnp.float32) + bqkv       # (N, 144)
    q = qkv[:, 0:D].reshape(bb, P, D)
    k = qkv[:, D:2 * D].reshape(bb, P, D)
    v = qkv[:, 2 * D:3 * D].reshape(bb, P, D)

    # Per-head scores: VPU outer product over all D lanes, then one MXU matmul segment-sums the
    # 4 lanes of each head:  s[b,i,j,h] = sum_{d in head h} q[b,i,d] * k[b,j,d].
    prod = q[:, :, None, :] * k[:, None, :, :]                               # (bb, P, P, D)
    s = jnp.dot(prod.reshape(N * P, D), m, preferred_element_type=jnp.float32)
    s = s.reshape(N, P, H)                                                   # rows=(b,i), j, h
    s = s - jnp.max(s, axis=1, keepdims=True)                                # softmax over j
    e = jnp.exp(s)
    a = e * pl.reciprocal(jnp.sum(e, axis=1, keepdims=True), approx=False)   # 1 recip / (row,head)

    # Spread each head's softmax weight over its 4 lanes, then contract j.
    aexp = jnp.dot(a.reshape(N * P, H), mt, preferred_element_type=jnp.float32)   # (N*P, 48)
    av = aexp.reshape(bb, P, P, D) * v[:, None, :, :]                        # (bb, P, P, D)
    attn_cat = jnp.sum(av, axis=2).reshape(N, D)                             # (N, 48) head-major

    attn_out = jnp.dot(attn_cat, wproj, preferred_element_type=jnp.float32) + bproj   # (N, 128)
    x1 = x + attn_out

    # ---------------- MLP branch ----------------
    xn2 = layernorm(x1, ln2_g, ln2_b)
    h1 = jnp.dot(xn2, wfc1, preferred_element_type=jnp.float32) + bfc1       # (N, 16)
    h1 = jax.nn.gelu(h1, approximate=True)   # tanh GELU; see TODO(synk) at top of file
    h2 = jnp.dot(h1, wfc2, preferred_element_type=jnp.float32) + bfc2        # (N, 128)
    # Dropout(p=0.0) is the identity.  Full-width, unmasked 128-lane store.
    o_ref[...] = x1 + h2


def prepare_params(p):
    """One-time conversion of PyTorch-convention params into a single packed kernel slab.

    Folds (a) the reference's head-interleaved column layout into a column permutation of the
    QKV weights/bias, (b) the attention scale head_dim**-0.5 (exactly 0.5) into the Q weight and
    bias, (c) the torch (out,in) -> (in,out) transposes, (d) the zero padding of the feature dim
    to 128 lanes, and (e) the constant head-membership matrices and LayerNorm lane mask.
    Call once at load time, not per forward.
    """
    D, H, hd = DIM, NUM_HEADS, HEAD_DIM
    f32 = jnp.float32
    scale = float(hd) ** -0.5
    # new column n (= h*hd + d) reads original column d*H + h
    perm = jnp.arange(D).reshape(hd, H).T.reshape(-1)
    wqkv_t = jnp.asarray(p["wqkv"], f32).T                 # (D, 3D); torch weight is (out, in)
    wq = wqkv_t[:, :D][:, perm] * scale
    wk = wqkv_t[:, D:2 * D][:, perm]
    wv = wqkv_t[:, 2 * D:][:, perm]
    bqkv_src = jnp.asarray(p["bqkv"], f32)
    bq = bqkv_src[:D][perm] * scale
    bk = bqkv_src[D:2 * D][perm]
    bv = bqkv_src[2 * D:][perm]
    wqkv = jnp.concatenate([wq, wk, wv], axis=1)           # (48, 144)
    bqkv = jnp.concatenate([bq, bk, bv])                   # (144,)
    m = (jnp.arange(D)[:, None] // hd == jnp.arange(H)[None, :]).astype(f32)   # (48, 12)

    slab = jnp.zeros((SLAB_ROWS, SLAB_COLS), f32)
    slab = slab.at[R_WQKV:R_WQKV + D, :].set(wqkv)         # rows 48:128 stay zero (padded lanes)
    slab = slab.at[R_BQKV, :].set(bqkv)
    slab = slab.at[R_LN1G, :D].set(jnp.asarray(p["g1"], f32))
    slab = slab.at[R_LN1B, :D].set(jnp.asarray(p["b1"], f32))
    slab = slab.at[R_LN2G, :D].set(jnp.asarray(p["g2"], f32))
    slab = slab.at[R_LN2B, :D].set(jnp.asarray(p["b2"], f32))
    slab = slab.at[R_BPROJ, :D].set(jnp.asarray(p["bproj"], f32))
    slab = slab.at[R_BFC2, :D].set(jnp.asarray(p["bfc2"], f32))
    slab = slab.at[R_BFC1, :MLP_HIDDEN].set(jnp.asarray(p["bfc1"], f32))
    slab = slab.at[R_MASK, :D].set(jnp.ones((D,), f32))
    slab = slab.at[R_WPROJ:R_WPROJ + D, :D].set(jnp.asarray(p["wproj"], f32).T)
    slab = slab.at[R_WFC1:R_WFC1 + D, :MLP_HIDDEN].set(jnp.asarray(p["wfc1"], f32).T)
    slab = slab.at[R_WFC2:R_WFC2 + MLP_HIDDEN, :D].set(jnp.asarray(p["wfc2"], f32).T)
    slab = slab.at[R_M:R_M + D, :H].set(m)
    slab = slab.at[R_MT:R_MT + H, :D].set(m.T)
    return slab


def block_forward(x, param_slab, *, rows_per_step=512):
    B, P, D = x.shape
    assert D == DIM

    # Batches folded per grid step: as many as fit `rows_per_step` rows.  No forced multi-chunk
    # split: it only hurt single-TC chips (v5e/v6e) and gives v7x tiles too small to matter.
    bb = max(1, min(B, max(1, rows_per_step // P)))
    # Cap bb so the O(bb*P^2*D) fp32 attention intermediates stay inside v7x's scoped VMEM.
    per_batch_bytes = 4 * (3 * P * P * DIM + 2 * P * P * NUM_HEADS + 4 * P * DIM_PAD)
    bb = max(1, min(bb, (20 * 1024 * 1024) // max(per_batch_bytes, 1)))
    n_chunks = -(-B // bb)
    if n_chunks > 1 and (bb * P) % 8 != 0:
        # Multi-chunk blocks must keep the (8, 128) sublane constraint; fall back to one block.
        # TODO(synk): a sublane-rounded bb would chunk this case too; not needed at these sizes.
        bb, n_chunks = B, 1
    B_pad = n_chunks * bb
    n_rows = bb * P

    # Lane-dense token slab: pad the feature dim 48 -> 128 (and batch to B_pad) once, outside
    # the kernel, so every in-kernel load/store is a full unmasked 128-lane access.
    xf = jnp.pad(x.reshape(B * P, D).astype(jnp.float32),
                 ((0, (B_pad - B) * P), (0, DIM_PAD - D)))

    kernel = functools.partial(block_kernel, bb, P)
    out = pl.pallas_call(
        kernel,
        out_shape=jax.ShapeDtypeStruct((B_pad * P, DIM_PAD), jnp.float32),
        grid_spec=pltpu.PrefetchScalarGridSpec(
            num_scalar_prefetch=0,
            grid=(n_chunks,),
            in_specs=[pl.BlockSpec((n_rows, DIM_PAD), lambda i: (i, 0)),
                      pl.BlockSpec((SLAB_ROWS, SLAB_COLS), lambda i: (0, 0))],
            out_specs=pl.BlockSpec((n_rows, DIM_PAD), lambda i: (i, 0)),
        ),
        compiler_params=pltpu.CompilerParams(
            dimension_semantics=("parallel",)),
    )(xf, param_slab)
    return out[:B * P, :D].reshape(B, P, D)


def reference(x, p):
    """Plain-JAX transcription of the PyTorch forward (torch weight conventions, exact GELU)."""
    D, H, hd = DIM, NUM_HEADS, HEAD_DIM
    B, P, _ = x.shape

    def ln(y, g, b):
        mu = y.mean(-1, keepdims=True)
        var = ((y - mu) ** 2).mean(-1, keepdims=True)
        return (y - mu) / jnp.sqrt(var + LN_EPS) * g + b

    xn = ln(x, p["g1"], p["b1"])
    qkv = xn @ p["wqkv"].T + p["bqkv"]                              # (B, P, 3D)
    qkv = jnp.transpose(qkv.reshape(B, P, 3, hd, H), (2, 0, 4, 1, 3))
    q, k, v = qkv[0], qkv[1], qkv[2]                                # (B, H, P, hd)
    att = jnp.einsum('bhpd,bhqd->bhpq', q, k) * hd ** -0.5
    att = jax.nn.softmax(att, axis=-1)
    o = jnp.einsum('bhpq,bhqd->bhpd', att, v)
    o = jnp.transpose(o, (0, 2, 1, 3)).reshape(B, P, D)
    o = o @ p["wproj"].T + p["bproj"]
    x = x + o
    xn2 = ln(x, p["g2"], p["b2"])
    h = jax.nn.gelu(xn2 @ p["wfc1"].T + p["bfc1"], approximate=False)
    h = h @ p["wfc2"].T + p["bfc2"]
    return x + h


if __name__ == "__main__":
    B, P, D = 4, 8, DIM
    key = jax.random.PRNGKey(0)
    kx, k0, k1, k2, k3, k4, k5, k6, k7, k8, k9 = jax.random.split(key, 11)

    x = jax.random.normal(kx, (B, P, D), jnp.float32)

    torch_params = {
        "g1": 1.0 + 0.1 * jax.random.normal(k0, (D,), jnp.float32),
        "b1": 0.05 * jax.random.normal(k1, (D,), jnp.float32),
        "wqkv": 0.02 * jax.random.normal(k2, (3 * D, D), jnp.float32),
        "bqkv": 0.02 * jax.random.normal(k3, (3 * D,), jnp.float32),
        "wproj": 0.02 * jax.random.normal(k4, (D, D), jnp.float32),
        "bproj": 0.02 * jax.random.normal(k5, (D,), jnp.float32),
        "g2": 1.0 + 0.1 * jax.random.normal(k6, (D,), jnp.float32),
        "b2": 0.05 * jax.random.normal(k7, (D,), jnp.float32),
        "wfc1": 0.02 * jax.random.normal(k8, (MLP_HIDDEN, D), jnp.float32),
        "bfc1": jnp.zeros((MLP_HIDDEN,), jnp.float32),
        "wfc2": 0.02 * jax.random.normal(k9, (D, MLP_HIDDEN), jnp.float32),
        "bfc2": jnp.zeros((D,), jnp.float32),
    }

    # One-time weight re-layout / packing, hoisted out of the forward path.
    param_slab = jax.block_until_ready(prepare_params(torch_params))

    fwd = jax.jit(block_forward)
    out = jax.block_until_ready(fwd(x, param_slab))
    ref = jax.block_until_ready(reference(x, torch_params))

    assert out.shape == (B, P, D)
    assert jnp.all(jnp.isfinite(out))
    max_err = float(jnp.max(jnp.abs(out - ref)))
    assert jnp.allclose(out, ref, rtol=1e-4, atol=1e-4), max_err
    print("KERNEL_OK")
</pallas_src>

<mosaic_0001>
module attributes {stable_mosaic.version = 11 : i64} {
  func.func @block_kernel(%arg0: i32, %arg1: memref<32x128xf32, #tpu.memory_space<vmem>>, %arg2: memref<400x144xf32, #tpu.memory_space<vmem>>, %arg3: memref<32x128xf32, #tpu.memory_space<vmem>>) attributes {dimension_semantics = [#tpu.dimension_semantics<parallel>], iteration_bounds = array<i64: 1>, scalar_prefetch = 0 : i64, scratch_operands = 0 : i64, tpu.core_type = #tpu.core_type<tc>, window_params = [{transform_indices = @transform_0, window_bounds = array<i64: 32, 128>}, {pipeline_mode = #tpu.pipeline_mode<synchronous>, transform_indices = @transform_1, window_bounds = array<i64: 400, 144>}, {transform_indices = @transform_2, window_bounds = array<i64: 32, 128>}]} {
    %c0 = arith.constant 0 : index
    %c0_0 = arith.constant 0 : index
    %0 = vector.load %arg1[%c0, %c0_0] : memref<32x128xf32, #tpu.memory_space<vmem>>, vector<32x128xf32>
    %c0_1 = arith.constant 0 : index
    %c0_2 = arith.constant 0 : index
    %1 = vector.load %arg2[%c0_1, %c0_2] : memref<400x144xf32, #tpu.memory_space<vmem>>, vector<128x144xf32>
    %c128 = arith.constant 128 : index
    %c0_3 = arith.constant 0 : index
    %2 = vector.load %arg2[%c128, %c0_3] : memref<400x144xf32, #tpu.memory_space<vmem>>, vector<1x144xf32>
    %c129 = arith.constant 129 : index
    %c0_4 = arith.constant 0 : index
    %3 = vector.load %arg2[%c129, %c0_4] : memref<400x144xf32, #tpu.memory_space<vmem>>, vector<1x128xf32>
    %c130 = arith.constant 130 : index
    %c0_5 = arith.constant 0 : index
    %4 = vector.load %arg2[%c130, %c0_5] : memref<400x144xf32, #tpu.memory_space<vmem>>, vector<1x128xf32>
    %c131 = arith.constant 131 : index
    %c0_6 = arith.constant 0 : index
    %5 = vector.load %arg2[%c131, %c0_6] : memref<400x144xf32, #tpu.memory_space<vmem>>, vector<1x128xf32>
    %c132 = arith.constant 132 : index
    %c0_7 = arith.constant 0 : index
    %6 = vector.load %arg2[%c132, %c0_7] : memref<400x144xf32, #tpu.memory_space<vmem>>, vector<1x128xf32>
    %c133 = arith.constant 133 : index
    %c0_8 = arith.constant 0 : index
    %7 = vector.load %arg2[%c133, %c0_8] : memref<400x144xf32, #tpu.memory_space<vmem>>, vector<1x128xf32>
    %c134 = arith.constant 134 : index
    %c0_9 = arith.constant 0 : index
    %8 = vector.load %arg2[%c134, %c0_9] : memref<400x144xf32, #tpu.memory_space<vmem>>, vector<1x128xf32>
    %c135 = arith.constant 135 : index
    %c0_10 = arith.constant 0 : index
    %9 = vector.load %arg2[%c135, %c0_10] : memref<400x144xf32, #tpu.memory_space<vmem>>, vector<1x16xf32>
    %c136 = arith.constant 136 : index
    %c0_11 = arith.constant 0 : index
    %10 = vector.load %arg2[%c136, %c0_11] : memref<400x144xf32, #tpu.memory_space<vmem>>, vector<1x128xf32>
    %c144 = arith.constant 144 : index
    %c0_12 = arith.constant 0 : index
    %11 = vector.load %arg2[%c144, %c0_12] : memref<400x144xf32, #tpu.memory_space<vmem>>, vector<48x128xf32>
    %c192 = arith.constant 192 : index
    %c0_13 = arith.constant 0 : index
    %12 = vector.load %arg2[%c192, %c0_13] : memref<400x144xf32, #tpu.memory_space<vmem>>, vector<128x16xf32>
    %c320 = arith.constant 320 : index
    %c0_14 = arith.constant 0 : index
    %13 = vector.load %arg2[%c320, %c0_14] : memref<400x144xf32, #tpu.memory_space<vmem>>, vector<16x128xf32>
    %c336 = arith.constant 336 : index
    %c0_15 = arith.constant 0 : index
    %14 = vector.load %arg2[%c336, %c0_15] : memref<400x144xf32, #tpu.memory_space<vmem>>, vector<48x12xf32>
    %c384 = arith.constant 384 : index
    %c0_16 = arith.constant 0 : index
    %15 = vector.load %arg2[%c384, %c0_16] : memref<400x144xf32, #tpu.memory_space<vmem>>, vector<12x48xf32>
    %cst = arith.constant dense<0.000000e+00> : vector<32xf32>
    %16 = vector.multi_reduction <add>, %0, %cst [1] : vector<32x128xf32> to vector<32xf32>
    %17 = vector.shape_cast %16 : vector<32xf32> to vector<32x1xf32>
    %cst_17 = arith.constant 0.020833334 : f32
    %18 = vector.broadcast %cst_17 : f32 to vector<32x1xf32>
    %19 = arith.mulf %17, %18 : vector<32x1xf32>
    %20 = vector.broadcast %19 : vector<32x1xf32> to vector<32x128xf32>
    %21 = arith.subf %0, %20 : vector<32x128xf32>
    %22 = vector.broadcast %10 : vector<1x128xf32> to vector<32x128xf32>
    %23 = arith.mulf %21, %22 : vector<32x128xf32>
    %24 = arith.mulf %23, %23 : vector<32x128xf32>
    %cst_18 = arith.constant dense<0.000000e+00> : vector<32xf32>
    %25 = vector.multi_reduction <add>, %24, %cst_18 [1] : vector<32x128xf32> to vector<32xf32>
    %26 = vector.shape_cast %25 : vector<32xf32> to vector<32x1xf32>
    %cst_19 = arith.constant 0.020833334 : f32
    %27 = vector.broadcast %cst_19 : f32 to vector<32x1xf32>
    %28 = arith.mulf %26, %27 : vector<32x1xf32>
    %cst_20 = arith.constant 9.99999974E-6 : f32
    %29 = vector.broadcast %cst_20 : f32 to vector<32x1xf32>
    %30 = arith.addf %28, %29 : vector<32x1xf32>
    %31 = math.rsqrt %30 : vector<32x1xf32>
    %32 = vector.broadcast %31 : vector<32x1xf32> to vector<32x128xf32>
    %33 = arith.mulf %23, %32 : vector<32x128xf32>
    %34 = vector.broadcast %3 : vector<1x128xf32> to vector<32x128xf32>
    %35 = arith.mulf %33, %34 : vector<32x128xf32>
    %36 = vector.broadcast %4 : vector<1x128xf32> to vector<32x128xf32>
    %37 = arith.addf %35, %36 : vector<32x128xf32>
    %cst_21 = arith.constant dense<0.000000e+00> : vector<32x144xf32>
    %38 = tpu.matmul %37, %1, %cst_21 {dimension_numbers = #tpu.dot_dimension_numbers<[1], [0], [0], [1], [0, 0, 1, 1], [], []>} : vector<32x128xf32>, vector<128x144xf32>, vector<32x144xf32> -> vector<32x144xf32>
    %39 = vector.broadcast %2 : vector<1x144xf32> to vector<32x144xf32>
    %40 = arith.addf %38, %39 : vector<32x144xf32>
    %41 = vector.extract_strided_slice %40 {offsets = [0, 0], sizes = [32, 48], strides = [1, 1]} : vector<32x144xf32> to vector<32x48xf32>
    %42 = vector.shape_cast %41 : vector<32x48xf32> to vector<4x8x48xf32>
    %43 = vector.extract_strided_slice %40 {offsets = [0, 48], sizes = [32, 48], strides = [1, 1]} : vector<32x144xf32> to vector<32x48xf32>
    %44 = vector.shape_cast %43 : vector<32x48xf32> to vector<4x8x48xf32>
    %45 = vector.extract_strided_slice %40 {offsets = [0, 96], sizes = [32, 48], strides = [1, 1]} : vector<32x144xf32> to vector<32x48xf32>
    %46 = vector.shape_cast %45 : vector<32x48xf32> to vector<4x8x48xf32>
    %47 = vector.shape_cast %42 : vector<4x8x48xf32> to vector<4x8x1x48xf32>
    %48 = vector.shape_cast %44 : vector<4x8x48xf32> to vector<4x1x8x48xf32>
    %49 = vector.broadcast %47 : vector<4x8x1x48xf32> to vector<4x8x8x48xf32>
    %50 = vector.broadcast %48 : vector<4x1x8x48xf32> to vector<4x8x8x48xf32>
    %51 = arith.mulf %49, %50 : vector<4x8x8x48xf32>
    %52 = vector.shape_cast %51 : vector<4x8x8x48xf32> to vector<256x48xf32>
    %cst_22 = arith.constant dense<0.000000e+00> : vector<256x12xf32>
    %53 = tpu.matmul %52, %14, %cst_22 {dimension_numbers = #tpu.dot_dimension_numbers<[1], [0], [0], [1], [0, 0, 1, 1], [], []>} : vector<256x48xf32>, vector<48x12xf32>, vector<256x12xf32> -> vector<256x12xf32>
    %54 = vector.shape_cast %53 : vector<256x12xf32> to vector<32x8x12xf32>
    %cst_23 = arith.constant dense<0xFF800000> : vector<32x12xf32>
    %55 = vector.multi_reduction <maximumf>, %54, %cst_23 [1] : vector<32x8x12xf32> to vector<32x12xf32>
    %56 = vector.shape_cast %55 : vector<32x12xf32> to vector<32x1x12xf32>
    %57 = vector.broadcast %56 : vector<32x1x12xf32> to vector<32x8x12xf32>
    %58 = arith.subf %54, %57 : vector<32x8x12xf32>
    %59 = math.exp %58 : vector<32x8x12xf32>
    %cst_24 = arith.constant dense<0.000000e+00> : vector<32x12xf32>
    %60 = vector.multi_reduction <add>, %59, %cst_24 [1] : vector<32x8x12xf32> to vector<32x12xf32>
    %61 = vector.shape_cast %60 : vector<32x12xf32> to vector<32x1x12xf32>
    %62 = tpu.reciprocal %61 : vector<32x1x12xf32> -> vector<32x1x12xf32>
    %63 = vector.broadcast %62 : vector<32x1x12xf32> to vector<32x8x12xf32>
    %64 = arith.mulf %59, %63 : vector<32x8x12xf32>
    %65 = vector.shape_cast %64 : vector<32x8x12xf32> to vector<256x12xf32>
    %cst_25 = arith.constant dense<0.000000e+00> : vector<256x48xf32>
    %66 = tpu.matmul %65, %15, %cst_25 {dimension_numbers = #tpu.dot_dimension_numbers<[1], [0], [0], [1], [0, 0, 1, 1], [], []>} : vector<256x12xf32>, vector<12x48xf32>, vector<256x48xf32> -> vector<256x48xf32>
    %67 = vector.shape_cast %66 : vector<256x48xf32> to vector<4x8x8x48xf32>
    %68 = vector.shape_cast %46 : vector<4x8x48xf32> to vector<4x1x8x48xf32>
    %69 = vector.broadcast %68 : vector<4x1x8x48xf32> to vector<4x8x8x48xf32>
    %70 = arith.mulf %67, %69 : vector<4x8x8x48xf32>
    %cst_26 = arith.constant dense<0.000000e+00> : vector<4x8x48xf32>
    %71 = vector.multi_reduction <add>, %70, %cst_26 [2] : vector<4x8x8x48xf32> to vector<4x8x48xf32>
    %72 = vector.shape_cast %71 : vector<4x8x48xf32> to vector<32x48xf32>
    %cst_27 = arith.constant dense<0.000000e+00> : vector<32x128xf32>
    %73 = tpu.matmul %72, %11, %cst_27 {dimension_numbers = #tpu.dot_dimension_numbers<[1], [0], [0], [1], [0, 0, 1, 1], [], []>} : vector<32x48xf32>, vector<48x128xf32>, vector<32x128xf32> -> vector<32x128xf32>
    %74 = vector.broadcast %7 : vector<1x128xf32> to vector<32x128xf32>
    %75 = arith.addf %73, %74 : vector<32x128xf32>
    %76 = arith.addf %0, %75 : vector<32x128xf32>
    %cst_28 = arith.constant dense<0.000000e+00> : vector<32xf32>
    %77 = vector.multi_reduction <add>, %76, %cst_28 [1] : vector<32x128xf32> to vector<32xf32>
    %78 = vector.shape_cast %77 : vector<32xf32> to vector<32x1xf32>
    %cst_29 = arith.constant 0.020833334 : f32
    %79 = vector.broadcast %cst_29 : f32 to vector<32x1xf32>
    %80 = arith.mulf %78, %79 : vector<32x1xf32>
    %81 = vector.broadcast %80 : vector<32x1xf32> to vector<32x128xf32>
    %82 = arith.subf %76, %81 : vector<32x128xf32>
    %83 = vector.broadcast %10 : vector<1x128xf32> to vector<32x128xf32>
    %84 = arith.mulf %82, %83 : vector<32x128xf32>
    %85 = arith.mulf %84, %84 : vector<32x128xf32>
    %cst_30 = arith.constant dense<0.000000e+00> : vector<32xf32>
    %86 = vector.multi_reduction <add>, %85, %cst_30 [1] : vector<32x128xf32> to vector<32xf32>
    %87 = vector.shape_cast %86 : vector<32xf32> to vector<32x1xf32>
    %cst_31 = arith.constant 0.020833334 : f32
    %88 = vector.broadcast %cst_31 : f32 to vector<32x1xf32>
    %89 = arith.mulf %87, %88 : vector<32x1xf32>
    %cst_32 = arith.constant 9.99999974E-6 : f32
    %90 = vector.broadcast %cst_32 : f32 to vector<32x1xf32>
    %91 = arith.addf %89, %90 : vector<32x1xf32>
    %92 = math.rsqrt %91 : vector<32x1xf32>
    %93 = vector.broadcast %92 : vector<32x1xf32> to vector<32x128xf32>
    %94 = arith.mulf %84, %93 : vector<32x128xf32>
    %95 = vector.broadcast %5 : vector<1x128xf32> to vector<32x128xf32>
    %96 = arith.mulf %94, %95 : vector<32x128xf32>
    %97 = vector.broadcast %6 : vector<1x128xf32> to vector<32x128xf32>
    %98 = arith.addf %96, %97 : vector<32x128xf32>
    %cst_33 = arith.constant dense<0.000000e+00> : vector<32x16xf32>
    %99 = tpu.matmul %98, %12, %cst_33 {dimension_numbers = #tpu.dot_dimension_numbers<[1], [0], [0], [1], [0, 0, 1, 1], [], []>} : vector<32x128xf32>, vector<128x16xf32>, vector<32x16xf32> -> vector<32x16xf32>
    %100 = vector.broadcast %9 : vector<1x16xf32> to vector<32x16xf32>
    %101 = arith.addf %99, %100 : vector<32x16xf32>
    %102 = arith.mulf %101, %101 : vector<32x16xf32>
    %103 = arith.mulf %101, %102 : vector<32x16xf32>
    %cst_34 = arith.constant 4.471500e-02 : f32
    %104 = vector.broadcast %cst_34 : f32 to vector<32x16xf32>
    %105 = arith.mulf %104, %103 : vector<32x16xf32>
    %106 = arith.addf %101, %105 : vector<32x16xf32>
    %cst_35 = arith.constant 0.797884583 : f32
    %107 = vector.broadcast %cst_35 : f32 to vector<32x16xf32>
    %108 = arith.mulf %107, %106 : vector<32x16xf32>
    %109 = math.tanh %108 : vector<32x16xf32>
    %cst_36 = arith.constant 1.000000e+00 : f32
    %110 = vector.broadcast %cst_36 : f32 to vector<32x16xf32>
    %111 = arith.addf %110, %109 : vector<32x16xf32>
    %cst_37 = arith.constant 5.000000e-01 : f32
    %112 = vector.broadcast %cst_37 : f32 to vector<32x16xf32>
    %113 = arith.mulf %112, %111 : vector<32x16xf32>
    %114 = arith.mulf %101, %113 : vector<32x16xf32>
    %cst_38 = arith.constant dense<0.000000e+00> : vector<32x128xf32>
    %115 = tpu.matmul %114, %13, %cst_38 {dimension_numbers = #tpu.dot_dimension_numbers<[1], [0], [0], [1], [0, 0, 1, 1], [], []>} : vector<32x16xf32>, vector<16x128xf32>, vector<32x128xf32> -> vector<32x128xf32>
    %116 = vector.broadcast %8 : vector<1x128xf32> to vector<32x128xf32>
    %117 = arith.addf %115, %116 : vector<32x128xf32>
    %118 = arith.addf %76, %117 : vector<32x128xf32>
    %c0_39 = arith.constant 0 : index
    %c0_40 = arith.constant 0 : index
    %119 = vector.load %arg3[%c0_39, %c0_40] : memref<32x128xf32, #tpu.memory_space<vmem>>, vector<32x128xf32>
    tpu.vector_store %arg3[%c0_39, %c0_40], %118 {strides = array<i32>} : memref<32x128xf32, #tpu.memory_space<vmem>>, vector<32x128xf32>,
    return
  }
  func.func @transform_0(%arg0: i32) -> (i32, i32) {
    %c0_i32 = arith.constant 0 : i32
    %c0_i32_0 = arith.constant 0 : i32
    return %arg0, %c0_i32 : i32, i32
  }
  func.func @transform_1(%arg0: i32) -> (i32, i32) {
    %c0_i32 = arith.constant 0 : i32
    %c0_i32_0 = arith.constant 0 : i32
    %c0_i32_1 = arith.constant 0 : i32
    return %c0_i32, %c0_i32_0 : i32, i32
  }
  func.func @transform_2(%arg0: i32) -> (i32, i32) {
    %c0_i32 = arith.constant 0 : i32
    %c0_i32_0 = arith.constant 0 : i32
    return %arg0, %c0_i32 : i32, i32
  }
}

</mosaic_0001>

<llo_original>
// kernel: block_forward.1
$region0: #{block_forward.1}
  #allocation0 [shape = 'u32[]', space=smem, size = 0x4, offset = 0x4, fixed_abs, tag = 'smem constant byte address 0x4 - core index']
  #allocation1 [shape = 'u32[144,128]{1,0:T(1,128)}', space=vmem, size = 0x12000, scoped, tag = 'internal scratch']
  %s0 = inlined_call_operand.vmem [shape: f32[32,128], index: 0, kind: input, shape index: {}]
  %s1 = inlined_call_operand.vmem [shape: f32[400,144], index: 1, kind: input, shape index: {}]
  %s2 = inlined_call_operand.vmem [shape: f32[32,128], index: 2, kind: output, shape index: {}]
  %s3 = sld [smem:[#allocation0]]
  $region18: #{block_forward.1} parent=0
    _
  %s5 = ssub.s32 1, %s3
  %s6 = scalar_select 0, %s5, %s3
  // Predicated region
  $region2: #{block_forward.1} parent=0 // pred_check
    _
  $region3: #{block_forward.1} parent=0 // pred_check_branch
    %8 = sbr.rel (0) target = $region5
  $region4: #{block_forward.1} parent=0 // pred_region
    _
  $region5: #{block_forward.1} parent=0 // pred_fallthru
    _
  // Predicated region
  $region6: #{block_forward.1} parent=0 // pred_check
    _
  $region7: #{block_forward.1} parent=0 // pred_check_branch
    %10 = sbr.rel (0) target = $region9
  $region8: #{block_forward.1} parent=0 // pred_region
    _
  $region9: #{block_forward.1} parent=0 // pred_fallthru
    _
  %v11 = vld [vmem:[%s0] sm:$0xff]
  %v12 = vld [vmem:[%s0 + $0x8] sm:$0xff]
  %v13 = vld [vmem:[%s0 + $0x10] sm:$0xff]
  %v14 = vld [vmem:[%s0 + $0x18] sm:$0xff]
  %v15 = vld [vmem:[%s1] sm:$0xff]
  %v16 = vld [vmem:[%s1 + $0x8] sm:$0xff]
  %v17 = vld [vmem:[%s1 + $0x10] sm:$0xff]
  %v18 = vld [vmem:[%s1 + $0x18] sm:$0xff]
  %v19 = vld [vmem:[%s1 + $0x20] sm:$0xff]
  %v20 = vld [vmem:[%s1 + $0x28] sm:$0xff]
  %v21 = vld [vmem:[%s1 + $0x30] sm:$0xff]
  %v22 = vld [vmem:[%s1 + $0x38] sm:$0xff]
  %v23 = vld [vmem:[%s1 + $0x40] sm:$0xff]
  %v24 = vld [vmem:[%s1 + $0x48] sm:$0xff]
  %v25 = vld [vmem:[%s1 + $0x50] sm:$0xff]
  %v26 = vld [vmem:[%s1 + $0x58] sm:$0xff]
  %v27 = vld [vmem:[%s1 + $0x60] sm:$0xff]
  %v28 = vld [vmem:[%s1 + $0x68] sm:$0xff]
  %v29 = vld [vmem:[%s1 + $0x70] sm:$0xff]
  %v30 = vld [vmem:[%s1 + $0x78] sm:$0xff]
  %v31 = vld [vmem:[%s1 + $0x80] sm:$0xff]
  %v32 = vld [vmem:[%s1 + $0x88] sm:$0xff]
  %v33 = vld [vmem:[%s1 + $0x90] sm:$0xff]
  %v34 = vld [vmem:[%s1 + $0x98] sm:$0xff]
  %v35 = vld [vmem:[%s1 + $0xa0] sm:$0xff]
  %v36 = vld [vmem:[%s1 + $0xa8] sm:$0xff]
  %v37 = vld [vmem:[%s1 + $0xb0] sm:$0xff]
  %v38 = vld [vmem:[%s1 + $0xb8] sm:$0xff]
  %v39 = vld [vmem:[%s1 + $0xc0] sm:$0xff]
  %v40 = vld [vmem:[%s1 + $0xc8] sm:$0xff]
  %v41 = vld [vmem:[%s1 + $0xd0] sm:$0xff]
  %v42 = vld [vmem:[%s1 + $0xd8] sm:$0xff]
  %v43 = vld [vmem:[%s1 + $0xe0] sm:$0xff]
  %v44 = vld [vmem:[%s1 + $0xe8] sm:$0xff]
  %v45 = vld [vmem:[%s1 + $0xf0] sm:$0xff]
  %v46 = vld [vmem:[%s1 + $0xf8] sm:$0xff]
  %s47 = scalar_lea.vmem %s1, 256
  %v48 = vld [vmem:[%s47] ss:$8 sm:$0x3]
  %v49 = vld [vmem:[%s1 + $0x101] ss:$0 sm:$0xff]
  %v50 = vld [vmem:[%s1 + $0x102] ss:$0 sm:$0xff]
  %v51 = vld [vmem:[%s1 + $0x103] ss:$0 sm:$0xff]
  %v52 = vld [vmem:[%s1 + $0x104] ss:$0 sm:$0xff]
  %v53 = vld [vmem:[%s1 + $0x105] ss:$0 sm:$0xff]
  %v54 = vld [vmem:[%s1 + $0x106] ss:$0 sm:$0xff]
  %v55 = vld [vmem:[%s1 + $0x107] ss:$0 sm:$0xff]
  %v56 = vld [vmem:[%s1 + $0x110] ss:$0 sm:$0xff]
  %v57 = vld [vmem:[%s1 + $0x120] sm:$0xff]
  %v58 = vld [vmem:[%s1 + $0x130] sm:$0xff]
  %v59 = vld [vmem:[%s1 + $0x140] sm:$0xff]
  %v60 = vld [vmem:[%s1 + $0x150] sm:$0xff]
  %v61 = vld [vmem:[%s1 + $0x160] sm:$0xff]
  %v62 = vld [vmem:[%s1 + $0x170] sm:$0xff]
  %v63 = vld [vmem:[%s1 + $0x180] sm:$0xff]
  %v64 = vld [vmem:[%s1 + $0x190] sm:$0xff]
  %v65 = vld [vmem:[%s1 + $0x1a0] sm:$0xff]
  %v66 = vld [vmem:[%s1 + $0x1b0] sm:$0xff]
  %v67 = vld [vmem:[%s1 + $0x1c0] sm:$0xff]
  %v68 = vld [vmem:[%s1 + $0x1d0] sm:$0xff]
  %v69 = vld [vmem:[%s1 + $0x1e0] sm:$0xff]
  %v70 = vld [vmem:[%s1 + $0x1f0] sm:$0xff]
  %v71 = vld [vmem:[%s1 + $0x200] sm:$0xff]
  %v72 = vld [vmem:[%s1 + $0x210] sm:$0xff]
  %v73 = vld [vmem:[%s1 + $0x220] sm:$0xff]
  %v74 = vld [vmem:[%s1 + $0x230] sm:$0xff]
  %v75 = vld [vmem:[%s1 + $0x240] sm:$0xff]
  %v76 = vld [vmem:[%s1 + $0x250] sm:$0xff]
  %v77 = vld [vmem:[%s1 + $0x260] sm:$0xff]
  %v78 = vld [vmem:[%s1 + $0x270] sm:$0xff]
  %v79 = vld [vmem:[%s1 + $0x280] sm:$0xff]
  %v80 = vld [vmem:[%s1 + $0x290] sm:$0xff]
  %v81 = vld [vmem:[%s1 + $0x2a0] sm:$0xff]
  %v82 = vld [vmem:[%s1 + $0x2b0] sm:$0xff]
  %v83 = vld [vmem:[%s1 + $0x2c0] sm:$0xff]
  %v84 = vld [vmem:[%s1 + $0x2d0] sm:$0xff]
  %v85 = vld [vmem:[%s1 + $0x2e0] sm:$0xff]
  %v86 = vld [vmem:[%s1 + $0x2f0] sm:$0xff]
  %v87 = vld [vmem:[%s1 + $0x300] sm:$0xff]
  %v88 = vld [vmem:[%s1 + $0x310] sm:$0xf]
  %89 = vadd.xlane.f32.xlu0 %v11
  %v90 = vpop.xlane.xlu0 %89
  %91 = vadd.xlane.f32.xlu0 %v12
  %v92 = vpop.xlane.xlu0 %91
  %93 = vadd.xlane.f32.xlu0 %v13
  %v94 = vpop.xlane.xlu0 %93
  %95 = vadd.xlane.f32.xlu0 %v14
  %v96 = vpop.xlane.xlu0 %95
  %v97 = vmul.f32 %v90, 0.020833334
  %v98 = vmul.f32 %v92, 0.020833334
  %v99 = vmul.f32 %v94, 0.020833334
  %v100 = vmul.f32 %v96, 0.020833334
  %v101 = vsub.f32 %v11, %v97
  %v102 = vsub.f32 %v12, %v98
  %v103 = vsub.f32 %v13, %v99
  %v104 = vsub.f32 %v14, %v100
  %v105 = vmul.f32 %v101, %v56
  %v106 = vmul.f32 %v102, %v56
  %v107 = vmul.f32 %v103, %v56
  %v108 = vmul.f32 %v104, %v56
  %v109 = vmul.f32 %v105, %v105
  %v110 = vmul.f32 %v106, %v106
  %v111 = vmul.f32 %v107, %v107
  %v112 = vmul.f32 %v108, %v108
  %113 = vadd.xlane.f32.xlu0 %v109
  %v114 = vpop.xlane.xlu0 %113
  %115 = vadd.xlane.f32.xlu0 %v110
  %v116 = vpop.xlane.xlu0 %115
  %117 = vadd.xlane.f32.xlu0 %v111
  %v118 = vpop.xlane.xlu0 %117
  %119 = vadd.xlane.f32.xlu0 %v112
  %v120 = vpop.xlane.xlu0 %119
  %v121 = vmul.f32 %v114, 0.020833334
  %v122 = vmul.f32 %v116, 0.020833334
  %v123 = vmul.f32 %v118, 0.020833334
  %v124 = vmul.f32 %v120, 0.020833334
  %v125 = vadd.f32 %v121, 1e-05
  %v126 = vadd.f32 %v122, 1e-05
  %v127 = vadd.f32 %v123, 1e-05
  %v128 = vadd.f32 %v124, 1e-05
  %v129 = vrsqrt.pop %v125
  %v130 = vrsqrt.pop %v126
  %v131 = vrsqrt.pop %v127
  %v132 = vrsqrt.pop %v128
  %v133 = vmul.f32 %v105, %v129
  %v134 = vmul.f32 %v106, %v130
  %v135 = vmul.f32 %v107, %v131
  %v136 = vmul.f32 %v108, %v132
  %v137 = vmul.f32 %v133, %v49
  %v138 = vmul.f32 %v134, %v49
  %v139 = vmul.f32 %v135, %v49
  %v140 = vmul.f32 %v136, %v49
  %v141 = vadd.f32 %v137, %v50
  %v142 = vadd.f32 %v138, %v50
  %v143 = vadd.f32 %v139, %v50
  %v144 = vadd.f32 %v140, %v50
  %v146 = vlaneseq
  %v147 = vshrl.u32 %v146, 7
  %v148 = vsub.s32 0, %v147
  %v149 = vrot.slane %v48, %v148
  %v150 = vlaneseq
  %v151 = vshrl.u32 %v150, 7
  %v152 = vsub.s32 1, %v151
  %v153 = vrot.slane %v48, %v152
  %156 = vmatprep.subr.mxu0 %v46
  %157 = vmatpush1.msra.mxu0 %v45
  %158 = vmatprep.subr.mxu0 %v44
  %159 = vmatpush1.msra.mxu0 %v43
  %160 = vmatprep.subr.mxu0 %v42
  %161 = vmatpush1.msra.mxu0 %v41
  %162 = vmatprep.subr.mxu0 %v40
  %163 = vmatpush1.msra.mxu0 %v39
  %164 = vmatprep.subr.mxu0 %v38
  %165 = vmatpush1.msra.mxu0 %v37
  %166 = vmatprep.subr.mxu0 %v36
  %167 = vmatpush1.msra.mxu0 %v35
  %168 = vmatprep.subr.mxu0 %v34
  %169 = vmatpush1.msra.mxu0 %v33
  %170 = vmatprep.subr.mxu0 %v32
  %171 = vmatpush1.msra.mxu0 %v31
  %172 = vmatprep.subr.mxu0 %v30
  %173 = vmatpush1.msra.mxu0 %v29
  %174 = vmatprep.subr.mxu0 %v28
  %175 = vmatpush1.msra.mxu0 %v27
  %176 = vmatprep.subr.mxu0 %v26
  %177 = vmatpush1.msra.mxu0 %v25
  %178 = vmatprep.subr.mxu0 %v24
  %179 = vmatpush1.msra.mxu0 %v23
  %180 = vmatprep.subr.mxu0 %v22
  %181 = vmatpush1.msra.mxu0 %v21
  %182 = vmatprep.subr.mxu0 %v20
  %183 = vmatpush1.msra.mxu0 %v19
  %184 = vmatprep.subr.mxu0 %v18
  %185 = vmatpush1.msra.mxu0 %v17
  %186 = vmatprep.subr.mxu0 %v16
  %187 = vmatpush1.msra.mxu0 %v15
  %188 = vmatprep.subr.mxu0 0.0
  %189 = vmatpush2.msra.mxu0 0.0
  %190 = vmatprep.subr.mxu0 0.0
  %191 = vmatpush2.msra.mxu0 0.0
  %192 = vmatprep.subr.mxu0 0.0
  %193 = vmatpush2.msra.mxu0 0.0
  %194 = vmatprep.subr.mxu0 0.0
  %195 = vmatpush2.msra.mxu0 0.0
  %196 = vmatprep.subr.mxu0 0.0
  %197 = vmatpush2.msra.mxu0 0.0
  %198 = vmatprep.subr.mxu0 0.0
  %199 = vmatpush2.msra.mxu0 0.0
  %200 = vmatprep.subr.mxu0 0.0
  %201 = vmatpush2.msra.mxu0 0.0
  %202 = vmatprep.subr.mxu0 0.0
  %203 = vmatpush2.msra.mxu0 0.0
  %204 = vmatprep.subr.mxu0 0.0
  %205 = vmatpush2.msra.mxu0 0.0
  %206 = vmatprep.subr.mxu0 0.0
  %207 = vmatpush2.msra.mxu0 0.0
  %208 = vmatprep.subr.mxu0 0.0
  %209 = vmatpush2.msra.mxu0 0.0
  %210 = vmatprep.subr.mxu0 0.0
  %211 = vmatpush2.msra.mxu0 0.0
  %212 = vmatprep.subr.mxu0 0.0
  %213 = vmatpush2.msra.mxu0 0.0
  %214 = vmatprep.subr.mxu0 0.0
  %215 = vmatpush2.msra.mxu0 0.0
  %216 = vmatprep.subr.mxu0 0.0
  %217 = vmatpush2.msra.mxu0 0.0
  %218 = vmatprep.subr.mxu0 0.0
  %219 = vmatpush2.msra.mxu0 0.0
  %220 = vmatprep.mubr.f32.mxu0 0.0
  %221 = vmatmul.mubr.f32.gmra.mxu0 %v141
  %v222 = vpop.f32.mrf.mxu0
  %v223 = vadd.f32 %v149, %v222
  %v224 = vpop.f32.mrf.mxu0
  %v225 = vadd.f32 %v153, %v224
  %226 = vmatprep.mubr.f32.mxu0 0.0
  %227 = vmatmul.mubr.f32.gmra.mxu0 %v142
  %v228 = vpop.f32.mrf.mxu0
  %v229 = vadd.f32 %v149, %v228
  %v230 = vpop.f32.mrf.mxu0
  %v231 = vadd.f32 %v153, %v230
  %232 = vmatprep.mubr.f32.mxu0 0.0
  %233 = vmatmul.mubr.f32.gmra.mxu0 %v143
  %v234 = vpop.f32.mrf.mxu0
  %v235 = vadd.f32 %v149, %v234
  %v236 = vpop.f32.mrf.mxu0
  %v237 = vadd.f32 %v153, %v236
  %238 = vmatprep.mubr.f32.mxu0 0.0
  %239 = vmatmul.mubr.f32.gmra.mxu0 %v144
  %v240 = vpop.f32.mrf.mxu0
  %v241 = vadd.f32 %v149, %v240
  %v242 = vpop.f32.mrf.mxu0
  %v243 = vadd.f32 %v153, %v242
  %244 = vdwg.mxu0
  %v249 = vcombine.high %v223, %v223
  %v251 = vunpack.c.l.s4 1966171168
  %v252 = vunpack.c.0.s8 %v251
  %v253 = vlaneseq
  %v254 = vshrl.u32 %v253, 7
  %v255 = vsub.s32 %v252, %v254
  %v256 = vrot.slane %v223, %v255
  %v258 = vunpack.c.l.s4 1966171168
  %v259 = vunpack.c.0.s8 %v258
  %v260 = vlaneseq
  %v261 = vshrl.u32 %v260, 7
  %v262 = vsub.s32 %v259, %v261
  %v263 = vrot.slane %v249, %v262
  %v264 = vcombine.high %v256, %v256
  %v265 = vcombine.high %v263, %v263
  %v267 = vunpack.c.l.s4 1966171168
  %v268 = vunpack.c.0.s8 %v267
  %v269 = vlaneseq
  %v270 = vshrl.u32 %v269, 7
  %v271 = vsub.s32 %v268, %v270
  %v272 = vrot.slane %v256, %v271
  %v274 = vunpack.c.l.s4 1966171168
  %v275 = vunpack.c.0.s8 %v274
  %v276 = vlaneseq
  %v277 = vshrl.u32 %v276, 7
  %v278 = vsub.s32 %v275, %v277
  %v279 = vrot.slane %v263, %v278
  %v281 = vunpack.c.l.s4 1966171168
  %v282 = vunpack.c.0.s8 %v281
  %v283 = vlaneseq
  %v284 = vshrl.u32 %v283, 7
  %v285 = vsub.s32 %v282, %v284
  %v286 = vrot.slane %v264, %v285
  %v288 = vunpack.c.l.s4 1966171168
  %v289 = vunpack.c.0.s8 %v288
  %v290 = vlaneseq
  %v291 = vshrl.u32 %v290, 7
  %v292 = vsub.s32 %v289, %v291
  %v293 = vrot.slane %v265, %v292
  %v294 = vcombine.high %v272, %v272
  %v295 = vcombine.high %v279, %v279
  %v296 = vcombine.high %v286, %v286
  %v297 = vcombine.high %v293, %v293
  %v298 = vcombine.high %v229, %v229
  %v300 = vunpack.c.l.s4 1966171168
  %v301 = vunpack.c.0.s8 %v300
  %v302 = vlaneseq
  %v303 = vshrl.u32 %v302, 7
  %v304 = vsub.s32 %v301, %v303
  %v305 = vrot.slane %v229, %v304
  %v307 = vunpack.c.l.s4 1966171168
  %v308 = vunpack.c.0.s8 %v307
  %v309 = vlaneseq
  %v310 = vshrl.u32 %v309, 7
  %v311 = vsub.s32 %v308, %v310
  %v312 = vrot.slane %v298, %v311
  %v313 = vcombine.high %v305, %v305
  %v314 = vcombine.high %v312, %v312
  %v316 = vunpack.c.l.s4 1966171168
  %v317 = vunpack.c.0.s8 %v316
  %v318 = vlaneseq
  %v319 = vshrl.u32 %v318, 7
  %v320 = vsub.s32 %v317, %v319
  %v321 = vrot.slane %v305, %v320
  %v323 = vunpack.c.l.s4 1966171168
  %v324 = vunpack.c.0.s8 %v323
  %v325 = vlaneseq
  %v326 = vshrl.u32 %v325, 7
  %v327 = vsub.s32 %v324, %v326
  %v328 = vrot.slane %v312, %v327
  %v330 = vunpack.c.l.s4 1966171168
  %v331 = vunpack.c.0.s8 %v330
  %v332 = vlaneseq
  %v333 = vshrl.u32 %v332, 7
  %v334 = vsub.s32 %v331, %v333
  %v335 = vrot.slane %v313, %v334
  %v337 = vunpack.c.l.s4 1966171168
  %v338 = vunpack.c.0.s8 %v337
  %v339 = vlaneseq
  %v340 = vshrl.u32 %v339, 7
  %v341 = vsub.s32 %v338, %v340
  %v342 = vrot.slane %v314, %v341
  %v343 = vcombine.high %v321, %v321
  %v344 = vcombine.high %v328, %v328
  %v345 = vcombine.high %v335, %v335
  %v346 = vcombine.high %v342, %v342
  %v347 = vcombine.high %v235, %v235
  %v349 = vunpack.c.l.s4 1966171168
  %v350 = vunpack.c.0.s8 %v349
  %v351 = vlaneseq
  %v352 = vshrl.u32 %v351, 7
  %v353 = vsub.s32 %v350, %v352
  %v354 = vrot.slane %v235, %v353
  %v356 = vunpack.c.l.s4 1966171168
  %v357 = vunpack.c.0.s8 %v356
  %v358 = vlaneseq
  %v359 = vshrl.u32 %v358, 7
  %v360 = vsub.s32 %v357, %v359
  %v361 = vrot.slane %v347, %v360
  %v362 = vcombine.high %v354, %v354
  %v363 = vcombine.high %v361, %v361
  %v365 = vunpack.c.l.s4 1966171168
  %v366 = vunpack.c.0.s8 %v365
  %v367 = vlaneseq
  %v368 = vshrl.u32 %v367, 7
  %v369 = vsub.s32 %v366, %v368
  %v370 = vrot.slane %v354, %v369
  %v372 = vunpack.c.l.s4 1966171168
  %v373 = vunpack.c.0.s8 %v372
  %v374 = vlaneseq
  %v375 = vshrl.u32 %v374, 7
  %v376 = vsub.s32 %v373, %v375
  %v377 = vrot.slane %v361, %v376
  %v379 = vunpack.c.l.s4 1966171168
  %v380 = vunpack.c.0.s8 %v379
  %v381 = vlaneseq
  %v382 = vshrl.u32 %v381, 7
  %v383 = vsub.s32 %v380, %v382
  %v384 = vrot.slane %v362, %v383
  %v386 = vunpack.c.l.s4 1966171168
  %v387 = vunpack.c.0.s8 %v386
  %v388 = vlaneseq
  %v389 = vshrl.u32 %v388, 7
  %v390 = vsub.s32 %v387, %v389
  %v391 = vrot.slane %v363, %v390
  %v392 = vcombine.high %v370, %v370
  %v393 = vcombine.high %v377, %v377
  %v394 = vcombine.high %v384, %v384
  %v395 = vcombine.high %v391, %v391
  %v396 = vcombine.high %v241, %v241
  %v398 = vunpack.c.l.s4 1966171168
  %v399 = vunpack.c.0.s8 %v398
  %v400 = vlaneseq
  %v401 = vshrl.u32 %v400, 7
  %v402 = vsub.s32 %v399, %v401
  %v403 = vrot.slane %v241, %v402
  %v405 = vunpack.c.l.s4 1966171168
  %v406 = vunpack.c.0.s8 %v405
  %v407 = vlaneseq
  %v408 = vshrl.u32 %v407, 7
  %v409 = vsub.s32 %v406, %v408
  %v410 = vrot.slane %v396, %v409
  %v411 = vcombine.high %v403, %v403
  %v412 = vcombine.high %v410, %v410
  %v414 = vunpack.c.l.s4 1966171168
  %v415 = vunpack.c.0.s8 %v414
  %v416 = vlaneseq
  %v417 = vshrl.u32 %v416, 7
  %v418 = vsub.s32 %v415, %v417
  %v419 = vrot.slane %v403, %v418
  %v421 = vunpack.c.l.s4 1966171168
  %v422 = vunpack.c.0.s8 %v421
  %v423 = vlaneseq
  %v424 = vshrl.u32 %v423, 7
  %v425 = vsub.s32 %v422, %v424
  %v426 = vrot.slane %v410, %v425
  %v428 = vunpack.c.l.s4 1966171168
  %v429 = vunpack.c.0.s8 %v428
  %v430 = vlaneseq
  %v431 = vshrl.u32 %v430, 7
  %v432 = vsub.s32 %v429, %v431
  %v433 = vrot.slane %v411, %v432
  %v435 = vunpack.c.l.s4 1966171168
  %v436 = vunpack.c.0.s8 %v435
  %v437 = vlaneseq
  %v438 = vshrl.u32 %v437, 7
  %v439 = vsub.s32 %v436, %v438
  %v440 = vrot.slane %v412, %v439
  %v441 = vcombine.high %v419, %v419
  %v442 = vcombine.high %v426, %v426
  %v443 = vcombine.high %v433, %v433
  %v444 = vcombine.high %v440, %v440
  %v445 = vlaneseq
  %v446 = vshrl.u32 %v445, 7
  %v447 = vsub.s32 0, %v446
  %v448 = vrot.slane %v272, %v447
  %v449 = vlaneseq
  %v450 = vshrl.u32 %v449, 7
  %v451 = vsub.s32 0, %v450
  %v452 = vrot.slane %v286, %v451
  %v453 = vlaneseq
  %v454 = vshrl.u32 %v453, 7
  %v455 = vsub.s32 0, %v454
  %v456 = vrot.slane %v294, %v455
  %v457 = vlaneseq
  %v458 = vshrl.u32 %v457, 7
  %v459 = vsub.s32 0, %v458
  %v460 = vrot.slane %v296, %v459
  %v461 = vlaneseq
  %v462 = vshrl.u32 %v461, 7
  %v463 = vsub.s32 0, %v462
  %v464 = vrot.slane %v279, %v463
  %v465 = vlaneseq
  %v466 = vshrl.u32 %v465, 7
  %v467 = vsub.s32 0, %v466
  %v468 = vrot.slane %v293, %v467
  %v469 = vlaneseq
  %v470 = vshrl.u32 %v469, 7
  %v471 = vsub.s32 0, %v470
  %v472 = vrot.slane %v295, %v471
  %v473 = vlaneseq
  %v474 = vshrl.u32 %v473, 7
  %v475 = vsub.s32 0, %v474
  %v476 = vrot.slane %v297, %v475
  %v477 = vlaneseq
  %v478 = vshrl.u32 %v477, 7
  %v479 = vsub.s32 0, %v478
  %v480 = vrot.slane %v321, %v479
  %v481 = vlaneseq
  %v482 = vshrl.u32 %v481, 7
  %v483 = vsub.s32 0, %v482
  %v484 = vrot.slane %v335, %v483
  %v485 = vlaneseq
  %v486 = vshrl.u32 %v485, 7
  %v487 = vsub.s32 0, %v486
  %v488 = vrot.slane %v343, %v487
  %v489 = vlaneseq
  %v490 = vshrl.u32 %v489, 7
  %v491 = vsub.s32 0, %v490
  %v492 = vrot.slane %v345, %v491
  %v493 = vlaneseq
  %v494 = vshrl.u32 %v493, 7
  %v495 = vsub.s32 0, %v494
  %v496 = vrot.slane %v328, %v495
  %v497 = vlaneseq
  %v498 = vshrl.u32 %v497, 7
  %v499 = vsub.s32 0, %v498
  %v500 = vrot.slane %v342, %v499
  %v501 = vlaneseq
  %v502 = vshrl.u32 %v501, 7
  %v503 = vsub.s32 0, %v502
  %v504 = vrot.slane %v344, %v503
  %v505 = vlaneseq
  %v506 = vshrl.u32 %v505, 7
  %v507 = vsub.s32 0, %v506
  %v508 = vrot.slane %v346, %v507
  %v509 = vlaneseq
  %v510 = vshrl.u32 %v509, 7
  %v511 = vsub.s32 0, %v510
  %v512 = vrot.slane %v370, %v511
  %v513 = vlaneseq
  %v514 = vshrl.u32 %v513, 7
  %v515 = vsub.s32 0, %v514
  %v516 = vrot.slane %v384, %v515
  %v517 = vlaneseq
  %v518 = vshrl.u32 %v517, 7
  %v519 = vsub.s32 0, %v518
  %v520 = vrot.slane %v392, %v519
  %v521 = vlaneseq
  %v522 = vshrl.u32 %v521, 7
  %v523 = vsub.s32 0, %v522
  %v524 = vrot.slane %v394, %v523
  %v525 = vlaneseq
  %v526 = vshrl.u32 %v525, 7
  %v527 = vsub.s32 0, %v526
  %v528 = vrot.slane %v377, %v527
  %v529 = vlaneseq
  %v530 = vshrl.u32 %v529, 7
  %v531 = vsub.s32 0, %v530
  %v532 = vrot.slane %v391, %v531
  %v533 = vlaneseq
  %v534 = vshrl.u32 %v533, 7
  %v535 = vsub.s32 0, %v534
  %v536 = vrot.slane %v393, %v535
  %v537 = vlaneseq
  %v538 = vshrl.u32 %v537, 7
  %v539 = vsub.s32 0, %v538
  %v540 = vrot.slane %v395, %v539
  %v541 = vlaneseq
  %v542 = vshrl.u32 %v541, 7
  %v543 = vsub.s32 0, %v542
  %v544 = vrot.slane %v419, %v543
  %v545 = vlaneseq
  %v546 = vshrl.u32 %v545, 7
  %v547 = vsub.s32 0, %v546
  %v548 = vrot.slane %v433, %v547
  %v549 = vlaneseq
  %v550 = vshrl.u32 %v549, 7
  %v551 = vsub.s32 0, %v550
  %v552 = vrot.slane %v441, %v551
  %v553 = vlaneseq
  %v554 = vshrl.u32 %v553, 7
  %v555 = vsub.s32 0, %v554
  %v556 = vrot.slane %v443, %v555
  %v557 = vlaneseq
  %v558 = vshrl.u32 %v557, 7
  %v559 = vsub.s32 0, %v558
  %v560 = vrot.slane %v426, %v559
  %v561 = vlaneseq
  %v562 = vshrl.u32 %v561, 7
  %v563 = vsub.s32 0, %v562
  %v564 = vrot.slane %v440, %v563
  %v565 = vlaneseq
  %v566 = vshrl.u32 %v565, 7
  %v567 = vsub.s32 0, %v566
  %v568 = vrot.slane %v442, %v567
  %v569 = vlaneseq
  %v570 = vshrl.u32 %v569, 7
  %v571 = vsub.s32 0, %v570
  %v572 = vrot.slane %v444, %v571
  %605 = vrot.lane.b32.xlu0 %v223, 80
  %v606 = vpop.permute.xlu0 %605
  %607 = vrot.lane.b32.xlu0 %v229, 80
  %v608 = vpop.permute.xlu0 %607
  %609 = vrot.lane.b32.xlu0 %v235, 80
  %v610 = vpop.permute.xlu0 %609
  %611 = vrot.lane.b32.xlu0 %v241, 80
  %v612 = vpop.permute.xlu0 %611
  %v617 = vmul.f32 %v448, %v606
  %v618 = vmul.f32 %v452, %v606
  %v619 = vmul.f32 %v456, %v606
  %v620 = vmul.f32 %v460, %v606
  %v621 = vmul.f32 %v464, %v606
  %v622 = vmul.f32 %v468, %v606
  %v623 = vmul.f32 %v472, %v606
  %v624 = vmul.f32 %v476, %v606
  %v625 = vmul.f32 %v480, %v608
  %v626 = vmul.f32 %v484, %v608
  %v627 = vmul.f32 %v488, %v608
  %v628 = vmul.f32 %v492, %v608
  %v629 = vmul.f32 %v496, %v608
  %v630 = vmul.f32 %v500, %v608
  %v631 = vmul.f32 %v504, %v608
  %v632 = vmul.f32 %v508, %v608
  %v633 = vmul.f32 %v512, %v610
  %v634 = vmul.f32 %v516, %v610
  %v635 = vmul.f32 %v520, %v610
  %v636 = vmul.f32 %v524, %v610
  %v637 = vmul.f32 %v528, %v610
  %v638 = vmul.f32 %v532, %v610
  %v639 = vmul.f32 %v536, %v610
  %v640 = vmul.f32 %v540, %v610
  %v641 = vmul.f32 %v544, %v612
  %v642 = vmul.f32 %v548, %v612
  %v643 = vmul.f32 %v552, %v612
  %v644 = vmul.f32 %v556, %v612
  %v645 = vmul.f32 %v560, %v612
  %v646 = vmul.f32 %v564, %v612
  %v647 = vmul.f32 %v568, %v612
  %v648 = vmul.f32 %v572, %v612
  %vm649 = vcmask 392192
  %v651 = vsel %vm649, %v617, 0
  %v654 = vsel %vm649, %v618, 0
  %v657 = vsel %vm649, %v619, 0
  %v660 = vsel %vm649, %v620, 0
  %v663 = vsel %vm649, %v621, 0
  %v666 = vsel %vm649, %v622, 0
  %v669 = vsel %vm649, %v623, 0
  %v672 = vsel %vm649, %v624, 0
  %v675 = vsel %vm649, %v625, 0
  %v678 = vsel %vm649, %v626, 0
  %v681 = vsel %vm649, %v627, 0
  %v684 = vsel %vm649, %v628, 0
  %v687 = vsel %vm649, %v629, 0
  %v690 = vsel %vm649, %v630, 0
  %v693 = vsel %vm649, %v631, 0
  %v696 = vsel %vm649, %v632, 0
  %v699 = vsel %vm649, %v633, 0
  %v702 = vsel %vm649, %v634, 0
  %v705 = vsel %vm649, %v635, 0
  %v708 = vsel %vm649, %v636, 0
  %v711 = vsel %vm649, %v637, 0
  %v714 = vsel %vm649, %v638, 0
  %v717 = vsel %vm649, %v639, 0
  %v720 = vsel %vm649, %v640, 0
  %v723 = vsel %vm649, %v641, 0
  %v726 = vsel %vm649, %v642, 0
  %v729 = vsel %vm649, %v643, 0
  %v732 = vsel %vm649, %v644, 0
  %v735 = vsel %vm649, %v645, 0
  %v738 = vsel %vm649, %v646, 0
  %v741 = vsel %vm649, %v647, 0
  %v744 = vsel %vm649, %v648, 0
  %746 = vmatprep.subr.mxu0 0.0
  %747 = vmatpush1.msra.mxu0 0.0
  %748 = vmatprep.subr.mxu0 0.0
  %749 = vmatpush1.msra.mxu0 0.0
  %750 = vmatprep.subr.mxu0 0.0
  %751 = vmatpush1.msra.mxu0 0.0
  %752 = vmatprep.subr.mxu0 0.0
  %753 = vmatpush1.msra.mxu0 0.0
  %754 = vmatprep.subr.mxu0 0.0
  %755 = vmatpush1.msra.mxu0 0.0
  %756 = vmatprep.subr.mxu0 0.0
  %757 = vmatpush1.msra.mxu0 0.0
  %758 = vmatprep.subr.mxu0 0.0
  %759 = vmatpush1.msra.mxu0 0.0
  %760 = vmatprep.subr.mxu0 0.0
  %761 = vmatpush1.msra.mxu0 0.0
  %762 = vmatprep.subr.mxu0 0.0
  %763 = vmatpush1.msra.mxu0 0.0
  %764 = vmatprep.subr.mxu0 0.0
  %765 = vmatpush1.msra.mxu0 0.0
  %766 = vmatprep.subr.mxu0 0.0
  %767 = vmatpush1.msra.mxu0 %v86
  %768 = vmatprep.subr.mxu0 0.0
  %769 = vmatpush1.msra.mxu0 %v85
  %770 = vmatprep.subr.mxu0 0.0
  %771 = vmatpush1.msra.mxu0 %v84
  %772 = vmatprep.subr.mxu0 0.0
  %773 = vmatpush1.msra.mxu0 %v83
  %774 = vmatprep.subr.mxu0 0.0
  %775 = vmatpush1.msra.mxu0 %v82
  %776 = vmatprep.subr.mxu0 0.0
  %777 = vmatpush1.msra.mxu0 %v81
  %778 = vmatprep.subr.mxu0 0.0
  %779 = vmatpush2.msra.mxu0 0.0
  %780 = vmatprep.subr.mxu0 0.0
  %781 = vmatpush2.msra.mxu0 0.0
  %782 = vmatprep.subr.mxu0 0.0
  %783 = vmatpush2.msra.mxu0 0.0
  %784 = vmatprep.subr.mxu0 0.0
  %785 = vmatpush2.msra.mxu0 0.0
  %786 = vmatprep.subr.mxu0 0.0
  %787 = vmatpush2.msra.mxu0 0.0
  %788 = vmatprep.subr.mxu0 0.0
  %789 = vmatpush2.msra.mxu0 0.0
  %790 = vmatprep.subr.mxu0 0.0
  %791 = vmatpush2.msra.mxu0 0.0
  %792 = vmatprep.subr.mxu0 0.0
  %793 = vmatpush2.msra.mxu0 0.0
  %794 = vmatprep.subr.mxu0 0.0
  %795 = vmatpush2.msra.mxu0 0.0
  %796 = vmatprep.subr.mxu0 0.0
  %797 = vmatpush2.msra.mxu0 0.0
  %798 = vmatprep.subr.mxu0 0.0
  %799 = vmatpush2.msra.mxu0 0.0
  %800 = vmatprep.subr.mxu0 0.0
  %801 = vmatpush2.msra.mxu0 0.0
  %802 = vmatprep.subr.mxu0 0.0
  %803 = vmatpush2.msra.mxu0 0.0
  %804 = vmatprep.subr.mxu0 0.0
  %805 = vmatpush2.msra.mxu0 0.0
  %806 = vmatprep.subr.mxu0 0.0
  %807 = vmatpush2.msra.mxu0 0.0
  %808 = vmatprep.subr.mxu0 0.0
  %809 = vmatpush2.msra.mxu0 0.0
  %810 = vmatprep.mubr.f32.mxu0 0.0
  %811 = vmatmul.mubr.f32.gmra.mxu0 %v651
  %v812 = vpop.f32.mrf.mxu0
  %v813 = vadd.f32 0.0, %v812
  %v814 = vpop.f32.mrf.mxu0
  %815 = vmatprep.mubr.f32.mxu0 0.0
  %816 = vmatmul.mubr.f32.gmra.mxu0 %v654
  %v817 = vpop.f32.mrf.mxu0
  %v818 = vadd.f32 0.0, %v817
  %v819 = vpop.f32.mrf.mxu0
  %820 = vmatprep.mubr.f32.mxu0 0.0
  %821 = vmatmul.mubr.f32.gmra.mxu0 %v657
  %v822 = vpop.f32.mrf.mxu0
  %v823 = vadd.f32 0.0, %v822
  %v824 = vpop.f32.mrf.mxu0
  %825 = vmatprep.mubr.f32.mxu0 0.0
  %826 = vmatmul.mubr.f32.gmra.mxu0 %v660
  %v827 = vpop.f32.mrf.mxu0
  %v828 = vadd.f32 0.0, %v827
  %v829 = vpop.f32.mrf.mxu0
  %830 = vmatprep.mubr.f32.mxu0 0.0
  %831 = vmatmul.mubr.f32.gmra.mxu0 %v663
  %v832 = vpop.f32.mrf.mxu0
  %v833 = vadd.f32 0.0, %v832
  %v834 = vpop.f32.mrf.mxu0
  %835 = vmatprep.mubr.f32.mxu0 0.0
  %836 = vmatmul.mubr.f32.gmra.mxu0 %v666
  %v837 = vpop.f32.mrf.mxu0
  %v838 = vadd.f32 0.0, %v837
  %v839 = vpop.f32.mrf.mxu0
  %840 = vmatprep.mubr.f32.mxu0 0.0
  %841 = vmatmul.mubr.f32.gmra.mxu0 %v669
  %v842 = vpop.f32.mrf.mxu0
  %v843 = vadd.f32 0.0, %v842
  %v844 = vpop.f32.mrf.mxu0
  %845 = vmatprep.mubr.f32.mxu0 0.0
  %846 = vmatmul.mubr.f32.gmra.mxu0 %v672
  %v847 = vpop.f32.mrf.mxu0
  %v848 = vadd.f32 0.0, %v847
  %v849 = vpop.f32.mrf.mxu0
  %850 = vmatprep.mubr.f32.mxu0 0.0
  %851 = vmatmul.mubr.f32.gmra.mxu0 %v675
  %v852 = vpop.f32.mrf.mxu0
  %v853 = vadd.f32 0.0, %v852
  %v854 = vpop.f32.mrf.mxu0
  %855 = vmatprep.mubr.f32.mxu0 0.0
  %856 = vmatmul.mubr.f32.gmra.mxu0 %v678
  %v857 = vpop.f32.mrf.mxu0
  %v858 = vadd.f32 0.0, %v857
  %v859 = vpop.f32.mrf.mxu0
  %860 = vmatprep.mubr.f32.mxu0 0.0
  %861 = vmatmul.mubr.f32.gmra.mxu0 %v681
  %v862 = vpop.f32.mrf.mxu0
  %v863 = vadd.f32 0.0, %v862
  %v864 = vpop.f32.mrf.mxu0
  %865 = vmatprep.mubr.f32.mxu0 0.0
  %866 = vmatmul.mubr.f32.gmra.mxu0 %v684
  %v867 = vpop.f32.mrf.mxu0
  %v868 = vadd.f32 0.0, %v867
  %v869 = vpop.f32.mrf.mxu0
  %870 = vmatprep.mubr.f32.mxu0 0.0
  %871 = vmatmul.mubr.f32.gmra.mxu0 %v687
  %v872 = vpop.f32.mrf.mxu0
  %v873 = vadd.f32 0.0, %v872
  %v874 = vpop.f32.mrf.mxu0
  %875 = vmatprep.mubr.f32.mxu0 0.0
  %876 = vmatmul.mubr.f32.gmra.mxu0 %v690
  %v877 = vpop.f32.mrf.mxu0
  %v878 = vadd.f32 0.0, %v877
  %v879 = vpop.f32.mrf.mxu0
  %880 = vmatprep.mubr.f32.mxu0 0.0
  %881 = vmatmul.mubr.f32.gmra.mxu0 %v693
  %v882 = vpop.f32.mrf.mxu0
  %v883 = vadd.f32 0.0, %v882
  %v884 = vpop.f32.mrf.mxu0
  %885 = vmatprep.mubr.f32.mxu0 0.0
  %886 = vmatmul.mubr.f32.gmra.mxu0 %v696
  %v887 = vpop.f32.mrf.mxu0
  %v888 = vadd.f32 0.0, %v887
  %v889 = vpop.f32.mrf.mxu0
  %890 = vmatprep.mubr.f32.mxu0 0.0
  %891 = vmatmul.mubr.f32.gmra.mxu0 %v699
  %v892 = vpop.f32.mrf.mxu0
  %v893 = vadd.f32 0.0, %v892
  %v894 = vpop.f32.mrf.mxu0
  %895 = vmatprep.mubr.f32.mxu0 0.0
  %896 = vmatmul.mubr.f32.gmra.mxu0 %v702
  %v897 = vpop.f32.mrf.mxu0
  %v898 = vadd.f32 0.0, %v897
  %v899 = vpop.f32.mrf.mxu0
  %900 = vmatprep.mubr.f32.mxu0 0.0
  %901 = vmatmul.mubr.f32.gmra.mxu0 %v705
  %v902 = vpop.f32.mrf.mxu0
  %v903 = vadd.f32 0.0, %v902
  %v904 = vpop.f32.mrf.mxu0
  %905 = vmatprep.mubr.f32.mxu0 0.0
  %906 = vmatmul.mubr.f32.gmra.mxu0 %v708
  %v907 = vpop.f32.mrf.mxu0
  %v908 = vadd.f32 0.0, %v907
  %v909 = vpop.f32.mrf.mxu0
  %910 = vmatprep.mubr.f32.mxu0 0.0
  %911 = vmatmul.mubr.f32.gmra.mxu0 %v711
  %v912 = vpop.f32.mrf.mxu0
  %v913 = vadd.f32 0.0, %v912
  %v914 = vpop.f32.mrf.mxu0
  %915 = vmatprep.mubr.f32.mxu0 0.0
  %916 = vmatmul.mubr.f32.gmra.mxu0 %v714
  %v917 = vpop.f32.mrf.mxu0
  %v918 = vadd.f32 0.0, %v917
  %v919 = vpop.f32.mrf.mxu0
  %920 = vmatprep.mubr.f32.mxu0 0.0
  %921 = vmatmul.mubr.f32.gmra.mxu0 %v717
  %v922 = vpop.f32.mrf.mxu0
  %v923 = vadd.f32 0.0, %v922
  %v924 = vpop.f32.mrf.mxu0
  %925 = vmatprep.mubr.f32.mxu0 0.0
  %926 = vmatmul.mubr.f32.gmra.mxu0 %v720
  %v927 = vpop.f32.mrf.mxu0
  %v928 = vadd.f32 0.0, %v927
  %v929 = vpop.f32.mrf.mxu0
  %930 = vmatprep.mubr.f32.mxu0 0.0
  %931 = vmatmul.mubr.f32.gmra.mxu0 %v723
  %v932 = vpop.f32.mrf.mxu0
  %v933 = vadd.f32 0.0, %v932
  %v934 = vpop.f32.mrf.mxu0
  %935 = vmatprep.mubr.f32.mxu0 0.0
  %936 = vmatmul.mubr.f32.gmra.mxu0 %v726
  %v937 = vpop.f32.mrf.mxu0
  %v938 = vadd.f32 0.0, %v937
  %v939 = vpop.f32.mrf.mxu0
  %940 = vmatprep.mubr.f32.mxu0 0.0
  %941 = vmatmul.mubr.f32.gmra.mxu0 %v729
  %v942 = vpop.f32.mrf.mxu0
  %v943 = vadd.f32 0.0, %v942
  %v944 = vpop.f32.mrf.mxu0
  %945 = vmatprep.mubr.f32.mxu0 0.0
  %946 = vmatmul.mubr.f32.gmra.mxu0 %v732
  %v947 = vpop.f32.mrf.mxu0
  %v948 = vadd.f32 0.0, %v947
  %v949 = vpop.f32.mrf.mxu0
  %950 = vmatprep.mubr.f32.mxu0 0.0
  %951 = vmatmul.mubr.f32.gmra.mxu0 %v735
  %v952 = vpop.f32.mrf.mxu0
  %v953 = vadd.f32 0.0, %v952
  %v954 = vpop.f32.mrf.mxu0
  %955 = vmatprep.mubr.f32.mxu0 0.0
  %956 = vmatmul.mubr.f32.gmra.mxu0 %v738
  %v957 = vpop.f32.mrf.mxu0
  %v958 = vadd.f32 0.0, %v957
  %v959 = vpop.f32.mrf.mxu0
  %960 = vmatprep.mubr.f32.mxu0 0.0
  %961 = vmatmul.mubr.f32.gmra.mxu0 %v741
  %v962 = vpop.f32.mrf.mxu0
  %v963 = vadd.f32 0.0, %v962
  %v964 = vpop.f32.mrf.mxu0
  %965 = vmatprep.mubr.f32.mxu0 0.0
  %966 = vmatmul.mubr.f32.gmra.mxu0 %v744
  %v967 = vpop.f32.mrf.mxu0
  %v968 = vadd.f32 0.0, %v967
  %v969 = vpop.f32.mrf.mxu0
  %970 = vdwg.mxu0
  %vm971 = vcmask 97280
  %v972 = vsel %vm971, %v813, -inf
  %v973 = vrot.slane %v972, 4
  %v974 = vmax.f32 %v972, %v973
  %v975 = vrot.slane %v974, 2
  %v976 = vmax.f32 %v974, %v975
  %v977 = vrot.slane %v976, 1
  %v978 = vmax.f32 %v976, %v977
  %v979 = vsel %vm971, %v818, -inf
  %v980 = vrot.slane %v979, 4
  %v981 = vmax.f32 %v979, %v980
  %v982 = vrot.slane %v981, 2
  %v983 = vmax.f32 %v981, %v982
  %v984 = vrot.slane %v983, 1
  %v985 = vmax.f32 %v983, %v984
  %v986 = vsel %vm971, %v823, -inf
  %v987 = vrot.slane %v986, 4
  %v988 = vmax.f32 %v986, %v987
  %v989 = vrot.slane %v988, 2
  %v990 = vmax.f32 %v988, %v989
  %v991 = vrot.slane %v990, 1
  %v992 = vmax.f32 %v990, %v991
  %v993 = vsel %vm971, %v828, -inf
  %v994 = vrot.slane %v993, 4
  %v995 = vmax.f32 %v993, %v994
  %v996 = vrot.slane %v995, 2
  %v997 = vmax.f32 %v995, %v996
  %v998 = vrot.slane %v997, 1
  %v999 = vmax.f32 %v997, %v998
  %v1000 = vsel %vm971, %v833, -inf
  %v1001 = vrot.slane %v1000, 4
  %v1002 = vmax.f32 %v1000, %v1001
  %v1003 = vrot.slane %v1002, 2
  %v1004 = vmax.f32 %v1002, %v1003
  %v1005 = vrot.slane %v1004, 1
  %v1006 = vmax.f32 %v1004, %v1005
  %v1007 = vsel %vm971, %v838, -inf
  %v1008 = vrot.slane %v1007, 4
  %v1009 = vmax.f32 %v1007, %v1008
  %v1010 = vrot.slane %v1009, 2
  %v1011 = vmax.f32 %v1009, %v1010
  %v1012 = vrot.slane %v1011, 1
  %v1013 = vmax.f32 %v1011, %v1012
  %v1014 = vsel %vm971, %v843, -inf
  %v1015 = vrot.slane %v1014, 4
  %v1016 = vmax.f32 %v1014, %v1015
  %v1017 = vrot.slane %v1016, 2
  %v1018 = vmax.f32 %v1016, %v1017
  %v1019 = vrot.slane %v1018, 1
  %v1020 = vmax.f32 %v1018, %v1019
  %v1021 = vsel %vm971, %v848, -inf
  %v1022 = vrot.slane %v1021, 4
  %v1023 = vmax.f32 %v1021, %v1022
  %v1024 = vrot.slane %v1023, 2
  %v1025 = vmax.f32 %v1023, %v1024
  %v1026 = vrot.slane %v1025, 1
  %v1027 = vmax.f32 %v1025, %v1026
  %v1028 = vsel %vm971, %v853, -inf
  %v1029 = vrot.slane %v1028, 4
  %v1030 = vmax.f32 %v1028, %v1029
  %v1031 = vrot.slane %v1030, 2
  %v1032 = vmax.f32 %v1030, %v1031
  %v1033 = vrot.slane %v1032, 1
  %v1034 = vmax.f32 %v1032, %v1033
  %v1035 = vsel %vm971, %v858, -inf
  %v1036 = vrot.slane %v1035, 4
  %v1037 = vmax.f32 %v1035, %v1036
  %v1038 = vrot.slane %v1037, 2
  %v1039 = vmax.f32 %v1037, %v1038
  %v1040 = vrot.slane %v1039, 1
  %v1041 = vmax.f32 %v1039, %v1040
  %v1042 = vsel %vm971, %v863, -inf
  %v1043 = vrot.slane %v1042, 4
  %v1044 = vmax.f32 %v1042, %v1043
  %v1045 = vrot.slane %v1044, 2
  %v1046 = vmax.f32 %v1044, %v1045
  %v1047 = vrot.slane %v1046, 1
  %v1048 = vmax.f32 %v1046, %v1047
  %v1049 = vsel %vm971, %v868, -inf
  %v1050 = vrot.slane %v1049, 4
  %v1051 = vmax.f32 %v1049, %v1050
  %v1052 = vrot.slane %v1051, 2
  %v1053 = vmax.f32 %v1051, %v1052
  %v1054 = vrot.slane %v1053, 1
  %v1055 = vmax.f32 %v1053, %v1054
  %v1056 = vsel %vm971, %v873, -inf
  %v1057 = vrot.slane %v1056, 4
  %v1058 = vmax.f32 %v1056, %v1057
  %v1059 = vrot.slane %v1058, 2
  %v1060 = vmax.f32 %v1058, %v1059
  %v1061 = vrot.slane %v1060, 1
  %v1062 = vmax.f32 %v1060, %v1061
  %v1063 = vsel %vm971, %v878, -inf
  %v1064 = vrot.slane %v1063, 4
  %v1065 = vmax.f32 %v1063, %v1064
  %v1066 = vrot.slane %v1065, 2
  %v1067 = vmax.f32 %v1065, %v1066
  %v1068 = vrot.slane %v1067, 1
  %v1069 = vmax.f32 %v1067, %v1068
  %v1070 = vsel %vm971, %v883, -inf
  %v1071 = vrot.slane %v1070, 4
  %v1072 = vmax.f32 %v1070, %v1071
  %v1073 = vrot.slane %v1072, 2
  %v1074 = vmax.f32 %v1072, %v1073
  %v1075 = vrot.slane %v1074, 1
  %v1076 = vmax.f32 %v1074, %v1075
  %v1077 = vsel %vm971, %v888, -inf
  %v1078 = vrot.slane %v1077, 4
  %v1079 = vmax.f32 %v1077, %v1078
  %v1080 = vrot.slane %v1079, 2
  %v1081 = vmax.f32 %v1079, %v1080
  %v1082 = vrot.slane %v1081, 1
  %v1083 = vmax.f32 %v1081, %v1082
  %v1084 = vsel %vm971, %v893, -inf
  %v1085 = vrot.slane %v1084, 4
  %v1086 = vmax.f32 %v1084, %v1085
  %v1087 = vrot.slane %v1086, 2
  %v1088 = vmax.f32 %v1086, %v1087
  %v1089 = vrot.slane %v1088, 1
  %v1090 = vmax.f32 %v1088, %v1089
  %v1091 = vsel %vm971, %v898, -inf
  %v1092 = vrot.slane %v1091, 4
  %v1093 = vmax.f32 %v1091, %v1092
  %v1094 = vrot.slane %v1093, 2
  %v1095 = vmax.f32 %v1093, %v1094
  %v1096 = vrot.slane %v1095, 1
  %v1097 = vmax.f32 %v1095, %v1096
  %v1098 = vsel %vm971, %v903, -inf
  %v1099 = vrot.slane %v1098, 4
  %v1100 = vmax.f32 %v1098, %v1099
  %v1101 = vrot.slane %v1100, 2
  %v1102 = vmax.f32 %v1100, %v1101
  %v1103 = vrot.slane %v1102, 1
  %v1104 = vmax.f32 %v1102, %v1103
  %v1105 = vsel %vm971, %v908, -inf
  %v1106 = vrot.slane %v1105, 4
  %v1107 = vmax.f32 %v1105, %v1106
  %v1108 = vrot.slane %v1107, 2
  %v1109 = vmax.f32 %v1107, %v1108
  %v1110 = vrot.slane %v1109, 1
  %v1111 = vmax.f32 %v1109, %v1110
  %v1112 = vsel %vm971, %v913, -inf
  %v1113 = vrot.slane %v1112, 4
  %v1114 = vmax.f32 %v1112, %v1113
  %v1115 = vrot.slane %v1114, 2
  %v1116 = vmax.f32 %v1114, %v1115
  %v1117 = vrot.slane %v1116, 1
  %v1118 = vmax.f32 %v1116, %v1117
  %v1119 = vsel %vm971, %v918, -inf
  %v1120 = vrot.slane %v1119, 4
  %v1121 = vmax.f32 %v1119, %v1120
  %v1122 = vrot.slane %v1121, 2
  %v1123 = vmax.f32 %v1121, %v1122
  %v1124 = vrot.slane %v1123, 1
  %v1125 = vmax.f32 %v1123, %v1124
  %v1126 = vsel %vm971, %v923, -inf
  %v1127 = vrot.slane %v1126, 4
  %v1128 = vmax.f32 %v1126, %v1127
  %v1129 = vrot.slane %v1128, 2
  %v1130 = vmax.f32 %v1128, %v1129
  %v1131 = vrot.slane %v1130, 1
  %v1132 = vmax.f32 %v1130, %v1131
  %v1133 = vsel %vm971, %v928, -inf
  %v1134 = vrot.slane %v1133, 4
  %v1135 = vmax.f32 %v1133, %v1134
  %v1136 = vrot.slane %v1135, 2
  %v1137 = vmax.f32 %v1135, %v1136
  %v1138 = vrot.slane %v1137, 1
  %v1139 = vmax.f32 %v1137, %v1138
  %v1140 = vsel %vm971, %v933, -inf
  %v1141 = vrot.slane %v1140, 4
  %v1142 = vmax.f32 %v1140, %v1141
  %v1143 = vrot.slane %v1142, 2
  %v1144 = vmax.f32 %v1142, %v1143
  %v1145 = vrot.slane %v1144, 1
  %v1146 = vmax.f32 %v1144, %v1145
  %v1147 = vsel %vm971, %v938, -inf
  %v1148 = vrot.slane %v1147, 4
  %v1149 = vmax.f32 %v1147, %v1148
  %v1150 = vrot.slane %v1149, 2
  %v1151 = vmax.f32 %v1149, %v1150
  %v1152 = vrot.slane %v1151, 1
  %v1153 = vmax.f32 %v1151, %v1152
  %v1154 = vsel %vm971, %v943, -inf
  %v1155 = vrot.slane %v1154, 4
  %v1156 = vmax.f32 %v1154, %v1155
  %v1157 = vrot.slane %v1156, 2
  %v1158 = vmax.f32 %v1156, %v1157
  %v1159 = vrot.slane %v1158, 1
  %v1160 = vmax.f32 %v1158, %v1159
  %v1161 = vsel %vm971, %v948, -inf
  %v1162 = vrot.slane %v1161, 4
  %v1163 = vmax.f32 %v1161, %v1162
  %v1164 = vrot.slane %v1163, 2
  %v1165 = vmax.f32 %v1163, %v1164
  %v1166 = vrot.slane %v1165, 1
  %v1167 = vmax.f32 %v1165, %v1166
  %v1168 = vsel %vm971, %v953, -inf
  %v1169 = vrot.slane %v1168, 4
  %v1170 = vmax.f32 %v1168, %v1169
  %v1171 = vrot.slane %v1170, 2
  %v1172 = vmax.f32 %v1170, %v1171
  %v1173 = vrot.slane %v1172, 1
  %v1174 = vmax.f32 %v1172, %v1173
  %v1175 = vsel %vm971, %v958, -inf
  %v1176 = vrot.slane %v1175, 4
  %v1177 = vmax.f32 %v1175, %v1176
  %v1178 = vrot.slane %v1177, 2
  %v1179 = vmax.f32 %v1177, %v1178
  %v1180 = vrot.slane %v1179, 1
  %v1181 = vmax.f32 %v1179, %v1180
  %v1182 = vsel %vm971, %v963, -inf
  %v1183 = vrot.slane %v1182, 4
  %v1184 = vmax.f32 %v1182, %v1183
  %v1185 = vrot.slane %v1184, 2
  %v1186 = vmax.f32 %v1184, %v1185
  %v1187 = vrot.slane %v1186, 1
  %v1188 = vmax.f32 %v1186, %v1187
  %v1189 = vsel %vm971, %v968, -inf
  %v1190 = vrot.slane %v1189, 4
  %v1191 = vmax.f32 %v1189, %v1190
  %v1192 = vrot.slane %v1191, 2
  %v1193 = vmax.f32 %v1191, %v1192
  %v1194 = vrot.slane %v1193, 1
  %v1195 = vmax.f32 %v1193, %v1194
  %v1196 = vsub.f32 %v813, %v978
  %v1197 = vsub.f32 %v818, %v985
  %v1198 = vsub.f32 %v823, %v992
  %v1199 = vsub.f32 %v828, %v999
  %v1200 = vsub.f32 %v833, %v1006
  %v1201 = vsub.f32 %v838, %v1013
  %v1202 = vsub.f32 %v843, %v1020
  %v1203 = vsub.f32 %v848, %v1027
  %v1204 = vsub.f32 %v853, %v1034
  %v1205 = vsub.f32 %v858, %v1041
  %v1206 = vsub.f32 %v863, %v1048
  %v1207 = vsub.f32 %v868, %v1055
  %v1208 = vsub.f32 %v873, %v1062
  %v1209 = vsub.f32 %v878, %v1069
  %v1210 = vsub.f32 %v883, %v1076
  %v1211 = vsub.f32 %v888, %v1083
  %v1212 = vsub.f32 %v893, %v1090
  %v1213 = vsub.f32 %v898, %v1097
  %v1214 = vsub.f32 %v903, %v1104
  %v1215 = vsub.f32 %v908, %v1111
  %v1216 = vsub.f32 %v913, %v1118
  %v1217 = vsub.f32 %v918, %v1125
  %v1218 = vsub.f32 %v923, %v1132
  %v1219 = vsub.f32 %v928, %v1139
  %v1220 = vsub.f32 %v933, %v1146
  %v1221 = vsub.f32 %v938, %v1153
  %v1222 = vsub.f32 %v943, %v1160
  %v1223 = vsub.f32 %v948, %v1167
  %v1224 = vsub.f32 %v953, %v1174
  %v1225 = vsub.f32 %v958, %v1181
  %v1226 = vsub.f32 %v963, %v1188
  %v1227 = vsub.f32 %v968, %v1195
  %v1228 = vmul.f32 %v1196, 1.442695
  %v1229 = vpow.pop %v1228
  %v1230 = vmul.f32 %v1197, 1.442695
  %v1231 = vpow.pop %v1230
  %v1232 = vmul.f32 %v1198, 1.442695
  %v1233 = vpow.pop %v1232
  %v1234 = vmul.f32 %v1199, 1.442695
  %v1235 = vpow.pop %v1234
  %v1236 = vmul.f32 %v1200, 1.442695
  %v1237 = vpow.pop %v1236
  %v1238 = vmul.f32 %v1201, 1.442695
  %v1239 = vpow.pop %v1238
  %v1240 = vmul.f32 %v1202, 1.442695
  %v1241 = vpow.pop %v1240
  %v1242 = vmul.f32 %v1203, 1.442695
  %v1243 = vpow.pop %v1242
  %v1244 = vmul.f32 %v1204, 1.442695
  %v1245 = vpow.pop %v1244
  %v1246 = vmul.f32 %v1205, 1.442695
  %v1247 = vpow.pop %v1246
  %v1248 = vmul.f32 %v1206, 1.442695
  %v1249 = vpow.pop %v1248
  %v1250 = vmul.f32 %v1207, 1.442695
  %v1251 = vpow.pop %v1250
  %v1252 = vmul.f32 %v1208, 1.442695
  %v1253 = vpow.pop %v1252
  %v1254 = vmul.f32 %v1209, 1.442695
  %v1255 = vpow.pop %v1254
  %v1256 = vmul.f32 %v1210, 1.442695
  %v1257 = vpow.pop %v1256
  %v1258 = vmul.f32 %v1211, 1.442695
  %v1259 = vpow.pop %v1258
  %v1260 = vmul.f32 %v1212, 1.442695
  %v1261 = vpow.pop %v1260
  %v1262 = vmul.f32 %v1213, 1.442695
  %v1263 = vpow.pop %v1262
  %v1264 = vmul.f32 %v1214, 1.442695
  %v1265 = vpow.pop %v1264
  %v1266 = vmul.f32 %v1215, 1.442695
  %v1267 = vpow.pop %v1266
  %v1268 = vmul.f32 %v1216, 1.442695
  %v1269 = vpow.pop %v1268
  %v1270 = vmul.f32 %v1217, 1.442695
  %v1271 = vpow.pop %v1270
  %v1272 = vmul.f32 %v1218, 1.442695
  %v1273 = vpow.pop %v1272
  %v1274 = vmul.f32 %v1219, 1.442695
  %v1275 = vpow.pop %v1274
  %v1276 = vmul.f32 %v1220, 1.442695
  %v1277 = vpow.pop %v1276
  %v1278 = vmul.f32 %v1221, 1.442695
  %v1279 = vpow.pop %v1278
  %v1280 = vmul.f32 %v1222, 1.442695
  %v1281 = vpow.pop %v1280
  %v1282 = vmul.f32 %v1223, 1.442695
  %v1283 = vpow.pop %v1282
  %v1284 = vmul.f32 %v1224, 1.442695
  %v1285 = vpow.pop %v1284
  %v1286 = vmul.f32 %v1225, 1.442695
  %v1287 = vpow.pop %v1286
  %v1288 = vmul.f32 %v1226, 1.442695
  %v1289 = vpow.pop %v1288
  %v1290 = vmul.f32 %v1227, 1.442695
  %v1291 = vpow.pop %v1290
  %v1292 = vsel %vm971, %v1229, 0.0
  %v1293 = vrot.slane %v1292, 4
  %v1294 = vadd.f32 %v1292, %v1293
  %v1295 = vrot.slane %v1294, 2
  %v1296 = vadd.f32 %v1294, %v1295
  %v1297 = vrot.slane %v1296, 1
  %v1298 = vadd.f32 %v1296, %v1297
  %v1299 = vsel %vm971, %v1231, 0.0
  %v1300 = vrot.slane %v1299, 4
  %v1301 = vadd.f32 %v1299, %v1300
  %v1302 = vrot.slane %v1301, 2
  %v1303 = vadd.f32 %v1301, %v1302
  %v1304 = vrot.slane %v1303, 1
  %v1305 = vadd.f32 %v1303, %v1304
  %v1306 = vsel %vm971, %v1233, 0.0
  %v1307 = vrot.slane %v1306, 4
  %v1308 = vadd.f32 %v1306, %v1307
  %v1309 = vrot.slane %v1308, 2
  %v1310 = vadd.f32 %v1308, %v1309
  %v1311 = vrot.slane %v1310, 1
  %v1312 = vadd.f32 %v1310, %v1311
  %v1313 = vsel %vm971, %v1235, 0.0
  %v1314 = vrot.slane %v1313, 4
  %v1315 = vadd.f32 %v1313, %v1314
  %v1316 = vrot.slane %v1315, 2
  %v1317 = vadd.f32 %v1315, %v1316
  %v1318 = vrot.slane %v1317, 1
  %v1319 = vadd.f32 %v1317, %v1318
  %v1320 = vsel %vm971, %v1237, 0.0
  %v1321 = vrot.slane %v1320, 4
  %v1322 = vadd.f32 %v1320, %v1321
  %v1323 = vrot.slane %v1322, 2
  %v1324 = vadd.f32 %v1322, %v1323
  %v1325 = vrot.slane %v1324, 1
  %v1326 = vadd.f32 %v1324, %v1325
  %v1327 = vsel %vm971, %v1239, 0.0
  %v1328 = vrot.slane %v1327, 4
  %v1329 = vadd.f32 %v1327, %v1328
  %v1330 = vrot.slane %v1329, 2
  %v1331 = vadd.f32 %v1329, %v1330
  %v1332 = vrot.slane %v1331, 1
  %v1333 = vadd.f32 %v1331, %v1332
  %v1334 = vsel %vm971, %v1241, 0.0
  %v1335 = vrot.slane %v1334, 4
  %v1336 = vadd.f32 %v1334, %v1335
  %v1337 = vrot.slane %v1336, 2
  %v1338 = vadd.f32 %v1336, %v1337
  %v1339 = vrot.slane %v1338, 1
  %v1340 = vadd.f32 %v1338, %v1339
  %v1341 = vsel %vm971, %v1243, 0.0
  %v1342 = vrot.slane %v1341, 4
  %v1343 = vadd.f32 %v1341, %v1342
  %v1344 = vrot.slane %v1343, 2
  %v1345 = vadd.f32 %v1343, %v1344
  %v1346 = vrot.slane %v1345, 1
  %v1347 = vadd.f32 %v1345, %v1346
  %v1348 = vsel %vm971, %v1245, 0.0
  %v1349 = vrot.slane %v1348, 4
  %v1350 = vadd.f32 %v1348, %v1349
  %v1351 = vrot.slane %v1350, 2
  %v1352 = vadd.f32 %v1350, %v1351
  %v1353 = vrot.slane %v1352, 1
  %v1354 = vadd.f32 %v1352, %v1353
  %v1355 = vsel %vm971, %v1247, 0.0
  %v1356 = vrot.slane %v1355, 4
  %v1357 = vadd.f32 %v1355, %v1356
  %v1358 = vrot.slane %v1357, 2
  %v1359 = vadd.f32 %v1357, %v1358
  %v1360 = vrot.slane %v1359, 1
  %v1361 = vadd.f32 %v1359, %v1360
  %v1362 = vsel %vm971, %v1249, 0.0
  %v1363 = vrot.slane %v1362, 4
  %v1364 = vadd.f32 %v1362, %v1363
  %v1365 = vrot.slane %v1364, 2
  %v1366 = vadd.f32 %v1364, %v1365
  %v1367 = vrot.slane %v1366, 1
  %v1368 = vadd.f32 %v1366, %v1367
  %v1369 = vsel %vm971, %v1251, 0.0
  %v1370 = vrot.slane %v1369, 4
  %v1371 = vadd.f32 %v1369, %v1370
  %v1372 = vrot.slane %v1371, 2
  %v1373 = vadd.f32 %v1371, %v1372
  %v1374 = vrot.slane %v1373, 1
  %v1375 = vadd.f32 %v1373, %v1374
  %v1376 = vsel %vm971, %v1253, 0.0
  %v1377 = vrot.slane %v1376, 4
  %v1378 = vadd.f32 %v1376, %v1377
  %v1379 = vrot.slane %v1378, 2
  %v1380 = vadd.f32 %v1378, %v1379
  %v1381 = vrot.slane %v1380, 1
  %v1382 = vadd.f32 %v1380, %v1381
  %v1383 = vsel %vm971, %v1255, 0.0
  %v1384 = vrot.slane %v1383, 4
  %v1385 = vadd.f32 %v1383, %v1384
  %v1386 = vrot.slane %v1385, 2
  %v1387 = vadd.f32 %v1385, %v1386
  %v1388 = vrot.slane %v1387, 1
  %v1389 = vadd.f32 %v1387, %v1388
  %v1390 = vsel %vm971, %v1257, 0.0
  %v1391 = vrot.slane %v1390, 4
  %v1392 = vadd.f32 %v1390, %v1391
  %v1393 = vrot.slane %v1392, 2
  %v1394 = vadd.f32 %v1392, %v1393
  %v1395 = vrot.slane %v1394, 1
  %v1396 = vadd.f32 %v1394, %v1395
  %v1397 = vsel %vm971, %v1259, 0.0
  %v1398 = vrot.slane %v1397, 4
  %v1399 = vadd.f32 %v1397, %v1398
  %v1400 = vrot.slane %v1399, 2
  %v1401 = vadd.f32 %v1399, %v1400
  %v1402 = vrot.slane %v1401, 1
  %v1403 = vadd.f32 %v1401, %v1402
  %v1404 = vsel %vm971, %v1261, 0.0
  %v1405 = vrot.slane %v1404, 4
  %v1406 = vadd.f32 %v1404, %v1405
  %v1407 = vrot.slane %v1406, 2
  %v1408 = vadd.f32 %v1406, %v1407
  %v1409 = vrot.slane %v1408, 1
  %v1410 = vadd.f32 %v1408, %v1409
  %v1411 = vsel %vm971, %v1263, 0.0
  %v1412 = vrot.slane %v1411, 4
  %v1413 = vadd.f32 %v1411, %v1412
  %v1414 = vrot.slane %v1413, 2
  %v1415 = vadd.f32 %v1413, %v1414
  %v1416 = vrot.slane %v1415, 1
  %v1417 = vadd.f32 %v1415, %v1416
  %v1418 = vsel %vm971, %v1265, 0.0
  %v1419 = vrot.slane %v1418, 4
  %v1420 = vadd.f32 %v1418, %v1419
  %v1421 = vrot.slane %v1420, 2
  %v1422 = vadd.f32 %v1420, %v1421
  %v1423 = vrot.slane %v1422, 1
  %v1424 = vadd.f32 %v1422, %v1423
  %v1425 = vsel %vm971, %v1267, 0.0
  %v1426 = vrot.slane %v1425, 4
  %v1427 = vadd.f32 %v1425, %v1426
  %v1428 = vrot.slane %v1427, 2
  %v1429 = vadd.f32 %v1427, %v1428
  %v1430 = vrot.slane %v1429, 1
  %v1431 = vadd.f32 %v1429, %v1430
  %v1432 = vsel %vm971, %v1269, 0.0
  %v1433 = vrot.slane %v1432, 4
  %v1434 = vadd.f32 %v1432, %v1433
  %v1435 = vrot.slane %v1434, 2
  %v1436 = vadd.f32 %v1434, %v1435
  %v1437 = vrot.slane %v1436, 1
  %v1438 = vadd.f32 %v1436, %v1437
  %v1439 = vsel %vm971, %v1271, 0.0
  %v1440 = vrot.slane %v1439, 4
  %v1441 = vadd.f32 %v1439, %v1440
  %v1442 = vrot.slane %v1441, 2
  %v1443 = vadd.f32 %v1441, %v1442
  %v1444 = vrot.slane %v1443, 1
  %v1445 = vadd.f32 %v1443, %v1444
  %v1446 = vsel %vm971, %v1273, 0.0
  %v1447 = vrot.slane %v1446, 4
  %v1448 = vadd.f32 %v1446, %v1447
  %v1449 = vrot.slane %v1448, 2
  %v1450 = vadd.f32 %v1448, %v1449
  %v1451 = vrot.slane %v1450, 1
  %v1452 = vadd.f32 %v1450, %v1451
  %v1453 = vsel %vm971, %v1275, 0.0
  %v1454 = vrot.slane %v1453, 4
  %v1455 = vadd.f32 %v1453, %v1454
  %v1456 = vrot.slane %v1455, 2
  %v1457 = vadd.f32 %v1455, %v1456
  %v1458 = vrot.slane %v1457, 1
  %v1459 = vadd.f32 %v1457, %v1458
  %v1460 = vsel %vm971, %v1277, 0.0
  %v1461 = vrot.slane %v1460, 4
  %v1462 = vadd.f32 %v1460, %v1461
  %v1463 = vrot.slane %v1462, 2
  %v1464 = vadd.f32 %v1462, %v1463
  %v1465 = vrot.slane %v1464, 1
  %v1466 = vadd.f32 %v1464, %v1465
  %v1467 = vsel %vm971, %v1279, 0.0
  %v1468 = vrot.slane %v1467, 4
  %v1469 = vadd.f32 %v1467, %v1468
  %v1470 = vrot.slane %v1469, 2
  %v1471 = vadd.f32 %v1469, %v1470
  %v1472 = vrot.slane %v1471, 1
  %v1473 = vadd.f32 %v1471, %v1472
  %v1474 = vsel %vm971, %v1281, 0.0
  %v1475 = vrot.slane %v1474, 4
  %v1476 = vadd.f32 %v1474, %v1475
  %v1477 = vrot.slane %v1476, 2
  %v1478 = vadd.f32 %v1476, %v1477
  %v1479 = vrot.slane %v1478, 1
  %v1480 = vadd.f32 %v1478, %v1479
  %v1481 = vsel %vm971, %v1283, 0.0
  %v1482 = vrot.slane %v1481, 4
  %v1483 = vadd.f32 %v1481, %v1482
  %v1484 = vrot.slane %v1483, 2
  %v1485 = vadd.f32 %v1483, %v1484
  %v1486 = vrot.slane %v1485, 1
  %v1487 = vadd.f32 %v1485, %v1486
  %v1488 = vsel %vm971, %v1285, 0.0
  %v1489 = vrot.slane %v1488, 4
  %v1490 = vadd.f32 %v1488, %v1489
  %v1491 = vrot.slane %v1490, 2
  %v1492 = vadd.f32 %v1490, %v1491
  %v1493 = vrot.slane %v1492, 1
  %v1494 = vadd.f32 %v1492, %v1493
  %v1495 = vsel %vm971, %v1287, 0.0
  %v1496 = vrot.slane %v1495, 4
  %v1497 = vadd.f32 %v1495, %v1496
  %v1498 = vrot.slane %v1497, 2
  %v1499 = vadd.f32 %v1497, %v1498
  %v1500 = vrot.slane %v1499, 1
  %v1501 = vadd.f32 %v1499, %v1500
  %v1502 = vsel %vm971, %v1289, 0.0
  %v1503 = vrot.slane %v1502, 4
  %v1504 = vadd.f32 %v1502, %v1503
  %v1505 = vrot.slane %v1504, 2
  %v1506 = vadd.f32 %v1504, %v1505
  %v1507 = vrot.slane %v1506, 1
  %v1508 = vadd.f32 %v1506, %v1507
  %v1509 = vsel %vm971, %v1291, 0.0
  %v1510 = vrot.slane %v1509, 4
  %v1511 = vadd.f32 %v1509, %v1510
  %v1512 = vrot.slane %v1511, 2
  %v1513 = vadd.f32 %v1511, %v1512
  %v1514 = vrot.slane %v1513, 1
  %v1515 = vadd.f32 %v1513, %v1514
  %v1516 = vrcp.pop %v1298
  %v1517 = vrcp.pop %v1305
  %v1518 = vrcp.pop %v1312
  %v1519 = vrcp.pop %v1319
  %v1520 = vrcp.pop %v1326
  %v1521 = vrcp.pop %v1333
  %v1522 = vrcp.pop %v1340
  %v1523 = vrcp.pop %v1347
  %v1524 = vrcp.pop %v1354
  %v1525 = vrcp.pop %v1361
  %v1526 = vrcp.pop %v1368
  %v1527 = vrcp.pop %v1375
  %v1528 = vrcp.pop %v1382
  %v1529 = vrcp.pop %v1389
  %v1530 = vrcp.pop %v1396
  %v1531 = vrcp.pop %v1403
  %v1532 = vrcp.pop %v1410
  %v1533 = vrcp.pop %v1417
  %v1534 = vrcp.pop %v1424
  %v1535 = vrcp.pop %v1431
  %v1536 = vrcp.pop %v1438
  %v1537 = vrcp.pop %v1445
  %v1538 = vrcp.pop %v1452
  %v1539 = vrcp.pop %v1459
  %v1540 = vrcp.pop %v1466
  %v1541 = vrcp.pop %v1473
  %v1542 = vrcp.pop %v1480
  %v1543 = vrcp.pop %v1487
  %v1544 = vrcp.pop %v1494
  %v1545 = vrcp.pop %v1501
  %v1546 = vrcp.pop %v1508
  %v1547 = vrcp.pop %v1515
  %v1548 = vmul.f32 %v1229, %v1516
  %v1549 = vmul.f32 %v1231, %v1517
  %v1550 = vmul.f32 %v1233, %v1518
  %v1551 = vmul.f32 %v1235, %v1519
  %v1552 = vmul.f32 %v1237, %v1520
  %v1553 = vmul.f32 %v1239, %v1521
  %v1554 = vmul.f32 %v1241, %v1522
  %v1555 = vmul.f32 %v1243, %v1523
  %v1556 = vmul.f32 %v1245, %v1524
  %v1557 = vmul.f32 %v1247, %v1525
  %v1558 = vmul.f32 %v1249, %v1526
  %v1559 = vmul.f32 %v1251, %v1527
  %v1560 = vmul.f32 %v1253, %v1528
  %v1561 = vmul.f32 %v1255, %v1529
  %v1562 = vmul.f32 %v1257, %v1530
  %v1563 = vmul.f32 %v1259, %v1531
  %v1564 = vmul.f32 %v1261, %v1532
  %v1565 = vmul.f32 %v1263, %v1533
  %v1566 = vmul.f32 %v1265, %v1534
  %v1567 = vmul.f32 %v1267, %v1535
  %v1568 = vmul.f32 %v1269, %v1536
  %v1569 = vmul.f32 %v1271, %v1537
  %v1570 = vmul.f32 %v1273, %v1538
  %v1571 = vmul.f32 %v1275, %v1539
  %v1572 = vmul.f32 %v1277, %v1540
  %v1573 = vmul.f32 %v1279, %v1541
  %v1574 = vmul.f32 %v1281, %v1542
  %v1575 = vmul.f32 %v1283, %v1543
  %v1576 = vmul.f32 %v1285, %v1544
  %v1577 = vmul.f32 %v1287, %v1545
  %v1578 = vmul.f32 %v1289, %v1546
  %v1579 = vmul.f32 %v1291, %v1547
  %v1581 = vsel %vm971, %v1548, 0
  %v1584 = vsel %vm971, %v1549, 0
  %v1587 = vsel %vm971, %v1550, 0
  %v1590 = vsel %vm971, %v1551, 0
  %v1593 = vsel %vm971, %v1552, 0
  %v1596 = vsel %vm971, %v1553, 0
  %v1599 = vsel %vm971, %v1554, 0
  %v1602 = vsel %vm971, %v1555, 0
  %v1605 = vsel %vm971, %v1556, 0
  %v1608 = vsel %vm971, %v1557, 0
  %v1611 = vsel %vm971, %v1558, 0
  %v1614 = vsel %vm971, %v1559, 0
  %v1617 = vsel %vm971, %v1560, 0
  %v1620 = vsel %vm971, %v1561, 0
  %v1623 = vsel %vm971, %v1562, 0
  %v1626 = vsel %vm971, %v1563, 0
  %v1629 = vsel %vm971, %v1564, 0
  %v1632 = vsel %vm971, %v1565, 0
  %v1635 = vsel %vm971, %v1566, 0
  %v1638 = vsel %vm971, %v1567, 0
  %v1641 = vsel %vm971, %v1568, 0
  %v1644 = vsel %vm971, %v1569, 0
  %v1647 = vsel %vm971, %v1570, 0
  %v1650 = vsel %vm971, %v1571, 0
  %v1653 = vsel %vm971, %v1572, 0
  %v1656 = vsel %vm971, %v1573, 0
  %v1659 = vsel %vm971, %v1574, 0
  %v1662 = vsel %vm971, %v1575, 0
  %v1665 = vsel %vm971, %v1576, 0
  %v1668 = vsel %vm971, %v1577, 0
  %v1671 = vsel %vm971, %v1578, 0
  %v1674 = vsel %vm971, %v1579, 0
  %vm1676 = vcmask 1043456
  %v1678 = vsel %vm1676, %v88, 0
  %1680 = vmatprep.subr.mxu0 0.0
  %1681 = vmatpush1.msra.mxu0 0.0
  %1682 = vmatprep.subr.mxu0 0.0
  %1683 = vmatpush1.msra.mxu0 0.0
  %1684 = vmatprep.subr.mxu0 0.0
  %1685 = vmatpush1.msra.mxu0 0.0
  %1686 = vmatprep.subr.mxu0 0.0
  %1687 = vmatpush1.msra.mxu0 0.0
  %1688 = vmatprep.subr.mxu0 0.0
  %1689 = vmatpush1.msra.mxu0 0.0
  %1690 = vmatprep.subr.mxu0 0.0
  %1691 = vmatpush1.msra.mxu0 0.0
  %1692 = vmatprep.subr.mxu0 0.0
  %1693 = vmatpush1.msra.mxu0 0.0
  %1694 = vmatprep.subr.mxu0 0.0
  %1695 = vmatpush1.msra.mxu0 0.0
  %1696 = vmatprep.subr.mxu0 0.0
  %1697 = vmatpush1.msra.mxu0 0.0
  %1698 = vmatprep.subr.mxu0 0.0
  %1699 = vmatpush1.msra.mxu0 0.0
  %1700 = vmatprep.subr.mxu0 0.0
  %1701 = vmatpush1.msra.mxu0 0.0
  %1702 = vmatprep.subr.mxu0 0.0
  %1703 = vmatpush1.msra.mxu0 0.0
  %1704 = vmatprep.subr.mxu0 0.0
  %1705 = vmatpush1.msra.mxu0 0.0
  %1706 = vmatprep.subr.mxu0 0.0
  %1707 = vmatpush1.msra.mxu0 0.0
  %1708 = vmatprep.subr.mxu0 0.0
  %1709 = vmatpush1.msra.mxu0 %v1678
  %1710 = vmatprep.subr.mxu0 0.0
  %1711 = vmatpush1.msra.mxu0 %v87
  %1712 = vmatprep.subr.mxu0 0.0
  %1713 = vmatpush2.msra.mxu0 0.0
  %1714 = vmatprep.subr.mxu0 0.0
  %1715 = vmatpush2.msra.mxu0 0.0
  %1716 = vmatprep.subr.mxu0 0.0
  %1717 = vmatpush2.msra.mxu0 0.0
  %1718 = vmatprep.subr.mxu0 0.0
  %1719 = vmatpush2.msra.mxu0 0.0
  %1720 = vmatprep.subr.mxu0 0.0
  %1721 = vmatpush2.msra.mxu0 0.0
  %1722 = vmatprep.subr.mxu0 0.0
  %1723 = vmatpush2.msra.mxu0 0.0
  %1724 = vmatprep.subr.mxu0 0.0
  %1725 = vmatpush2.msra.mxu0 0.0
  %1726 = vmatprep.subr.mxu0 0.0
  %1727 = vmatpush2.msra.mxu0 0.0
  %1728 = vmatprep.subr.mxu0 0.0
  %1729 = vmatpush2.msra.mxu0 0.0
  %1730 = vmatprep.subr.mxu0 0.0
  %1731 = vmatpush2.msra.mxu0 0.0
  %1732 = vmatprep.subr.mxu0 0.0
  %1733 = vmatpush2.msra.mxu0 0.0
  %1734 = vmatprep.subr.mxu0 0.0
  %1735 = vmatpush2.msra.mxu0 0.0
  %1736 = vmatprep.subr.mxu0 0.0
  %1737 = vmatpush2.msra.mxu0 0.0
  %1738 = vmatprep.subr.mxu0 0.0
  %1739 = vmatpush2.msra.mxu0 0.0
  %1740 = vmatprep.subr.mxu0 0.0
  %1741 = vmatpush2.msra.mxu0 0.0
  %1742 = vmatprep.subr.mxu0 0.0
  %1743 = vmatpush2.msra.mxu0 0.0
  %1744 = vmatprep.mubr.f32.mxu0 0.0
  %1745 = vmatmul.mubr.f32.gmra.mxu0 %v1581
  %v1746 = vpop.f32.mrf.mxu0
  %v1747 = vadd.f32 0.0, %v1746
  %v1748 = vpop.f32.mrf.mxu0
  %1749 = vmatprep.mubr.f32.mxu0 0.0
  %1750 = vmatmul.mubr.f32.gmra.mxu0 %v1584
  %v1751 = vpop.f32.mrf.mxu0
  %v1752 = vadd.f32 0.0, %v1751
  %v1753 = vpop.f32.mrf.mxu0
  %1754 = vmatprep.mubr.f32.mxu0 0.0
  %1755 = vmatmul.mubr.f32.gmra.mxu0 %v1587
  %v1756 = vpop.f32.mrf.mxu0
  %v1757 = vadd.f32 0.0, %v1756
  %v1758 = vpop.f32.mrf.mxu0
  %1759 = vmatprep.mubr.f32.mxu0 0.0
  %1760 = vmatmul.mubr.f32.gmra.mxu0 %v1590
  %v1761 = vpop.f32.mrf.mxu0
  %v1762 = vadd.f32 0.0, %v1761
  %v1763 = vpop.f32.mrf.mxu0
  %1764 = vmatprep.mubr.f32.mxu0 0.0
  %1765 = vmatmul.mubr.f32.gmra.mxu0 %v1593
  %v1766 = vpop.f32.mrf.mxu0
  %v1767 = vadd.f32 0.0, %v1766
  %v1768 = vpop.f32.mrf.mxu0
  %1769 = vmatprep.mubr.f32.mxu0 0.0
  %1770 = vmatmul.mubr.f32.gmra.mxu0 %v1596
  %v1771 = vpop.f32.mrf.mxu0
  %v1772 = vadd.f32 0.0, %v1771
  %v1773 = vpop.f32.mrf.mxu0
  %1774 = vmatprep.mubr.f32.mxu0 0.0
  %1775 = vmatmul.mubr.f32.gmra.mxu0 %v1599
  %v1776 = vpop.f32.mrf.mxu0
  %v1777 = vadd.f32 0.0, %v1776
  %v1778 = vpop.f32.mrf.mxu0
  %1779 = vmatprep.mubr.f32.mxu0 0.0
  %1780 = vmatmul.mubr.f32.gmra.mxu0 %v1602
  %v1781 = vpop.f32.mrf.mxu0
  %v1782 = vadd.f32 0.0, %v1781
  %v1783 = vpop.f32.mrf.mxu0
  %1784 = vmatprep.mubr.f32.mxu0 0.0
  %1785 = vmatmul.mubr.f32.gmra.mxu0 %v1605
  %v1786 = vpop.f32.mrf.mxu0
  %v1787 = vadd.f32 0.0, %v1786
  %v1788 = vpop.f32.mrf.mxu0
  %1789 = vmatprep.mubr.f32.mxu0 0.0
  %1790 = vmatmul.mubr.f32.gmra.mxu0 %v1608
  %v1791 = vpop.f32.mrf.mxu0
  %v1792 = vadd.f32 0.0, %v1791
  %v1793 = vpop.f32.mrf.mxu0
  %1794 = vmatprep.mubr.f32.mxu0 0.0
  %1795 = vmatmul.mubr.f32.gmra.mxu0 %v1611
  %v1796 = vpop.f32.mrf.mxu0
  %v1797 = vadd.f32 0.0, %v1796
  %v1798 = vpop.f32.mrf.mxu0
  %1799 = vmatprep.mubr.f32.mxu0 0.0
  %1800 = vmatmul.mubr.f32.gmra.mxu0 %v1614
  %v1801 = vpop.f32.mrf.mxu0
  %v1802 = vadd.f32 0.0, %v1801
  %v1803 = vpop.f32.mrf.mxu0
  %1804 = vmatprep.mubr.f32.mxu0 0.0
  %1805 = vmatmul.mubr.f32.gmra.mxu0 %v1617
  %v1806 = vpop.f32.mrf.mxu0
  %v1807 = vadd.f32 0.0, %v1806
  %v1808 = vpop.f32.mrf.mxu0
  %1809 = vmatprep.mubr.f32.mxu0 0.0
  %1810 = vmatmul.mubr.f32.gmra.mxu0 %v1620
  %v1811 = vpop.f32.mrf.mxu0
  %v1812 = vadd.f32 0.0, %v1811
  %v1813 = vpop.f32.mrf.mxu0
  %1814 = vmatprep.mubr.f32.mxu0 0.0
  %1815 = vmatmul.mubr.f32.gmra.mxu0 %v1623
  %v1816 = vpop.f32.mrf.mxu0
  %v1817 = vadd.f32 0.0, %v1816
  %v1818 = vpop.f32.mrf.mxu0
  %1819 = vmatprep.mubr.f32.mxu0 0.0
  %1820 = vmatmul.mubr.f32.gmra.mxu0 %v1626
  %v1821 = vpop.f32.mrf.mxu0
  %v1822 = vadd.f32 0.0, %v1821
  %v1823 = vpop.f32.mrf.mxu0
  %1824 = vmatprep.mubr.f32.mxu0 0.0
  %1825 = vmatmul.mubr.f32.gmra.mxu0 %v1629
  %v1826 = vpop.f32.mrf.mxu0
  %v1827 = vadd.f32 0.0, %v1826
  %v1828 = vpop.f32.mrf.mxu0
  %1829 = vmatprep.mubr.f32.mxu0 0.0
  %1830 = vmatmul.mubr.f32.gmra.mxu0 %v1632
  %v1831 = vpop.f32.mrf.mxu0
  %v1832 = vadd.f32 0.0, %v1831
  %v1833 = vpop.f32.mrf.mxu0
  %1834 = vmatprep.mubr.f32.mxu0 0.0
  %1835 = vmatmul.mubr.f32.gmra.mxu0 %v1635
  %v1836 = vpop.f32.mrf.mxu0
  %v1837 = vadd.f32 0.0, %v1836
  %v1838 = vpop.f32.mrf.mxu0
  %1839 = vmatprep.mubr.f32.mxu0 0.0
  %1840 = vmatmul.mubr.f32.gmra.mxu0 %v1638
  %v1841 = vpop.f32.mrf.mxu0
  %v1842 = vadd.f32 0.0, %v1841
  %v1843 = vpop.f32.mrf.mxu0
  %1844 = vmatprep.mubr.f32.mxu0 0.0
  %1845 = vmatmul.mubr.f32.gmra.mxu0 %v1641
  %v1846 = vpop.f32.mrf.mxu0
  %v1847 = vadd.f32 0.0, %v1846
  %v1848 = vpop.f32.mrf.mxu0
  %1849 = vmatprep.mubr.f32.mxu0 0.0
  %1850 = vmatmul.mubr.f32.gmra.mxu0 %v1644
  %v1851 = vpop.f32.mrf.mxu0
  %v1852 = vadd.f32 0.0, %v1851
  %v1853 = vpop.f32.mrf.mxu0
  %1854 = vmatprep.mubr.f32.mxu0 0.0
  %1855 = vmatmul.mubr.f32.gmra.mxu0 %v1647
  %v1856 = vpop.f32.mrf.mxu0
  %v1857 = vadd.f32 0.0, %v1856
  %v1858 = vpop.f32.mrf.mxu0
  %1859 = vmatprep.mubr.f32.mxu0 0.0
  %1860 = vmatmul.mubr.f32.gmra.mxu0 %v1650
  %v1861 = vpop.f32.mrf.mxu0
  %v1862 = vadd.f32 0.0, %v1861
  %v1863 = vpop.f32.mrf.mxu0
  %1864 = vmatprep.mubr.f32.mxu0 0.0
  %1865 = vmatmul.mubr.f32.gmra.mxu0 %v1653
  %v1866 = vpop.f32.mrf.mxu0
  %v1867 = vadd.f32 0.0, %v1866
  %v1868 = vpop.f32.mrf.mxu0
  %1869 = vmatprep.mubr.f32.mxu0 0.0
  %1870 = vmatmul.mubr.f32.gmra.mxu0 %v1656
  %v1871 = vpop.f32.mrf.mxu0
  %v1872 = vadd.f32 0.0, %v1871
  %v1873 = vpop.f32.mrf.mxu0
  %1874 = vmatprep.mubr.f32.mxu0 0.0
  %1875 = vmatmul.mubr.f32.gmra.mxu0 %v1659
  %v1876 = vpop.f32.mrf.mxu0
  %v1877 = vadd.f32 0.0, %v1876
  %v1878 = vpop.f32.mrf.mxu0
  %1879 = vmatprep.mubr.f32.mxu0 0.0
  %1880 = vmatmul.mubr.f32.gmra.mxu0 %v1662
  %v1881 = vpop.f32.mrf.mxu0
  %v1882 = vadd.f32 0.0, %v1881
  %v1883 = vpop.f32.mrf.mxu0
  %1884 = vmatprep.mubr.f32.mxu0 0.0
  %1885 = vmatmul.mubr.f32.gmra.mxu0 %v1665
  %v1886 = vpop.f32.mrf.mxu0
  %v1887 = vadd.f32 0.0, %v1886
  %v1888 = vpop.f32.mrf.mxu0
  %1889 = vmatprep.mubr.f32.mxu0 0.0
  %1890 = vmatmul.mubr.f32.gmra.mxu0 %v1668
  %v1891 = vpop.f32.mrf.mxu0
  %v1892 = vadd.f32 0.0, %v1891
  %v1893 = vpop.f32.mrf.mxu0
  %1894 = vmatprep.mubr.f32.mxu0 0.0
  %1895 = vmatmul.mubr.f32.gmra.mxu0 %v1671
  %v1896 = vpop.f32.mrf.mxu0
  %v1897 = vadd.f32 0.0, %v1896
  %v1898 = vpop.f32.mrf.mxu0
  %1899 = vmatprep.mubr.f32.mxu0 0.0
  %1900 = vmatmul.mubr.f32.gmra.mxu0 %v1674
  %v1901 = vpop.f32.mrf.mxu0
  %v1902 = vadd.f32 0.0, %v1901
  %v1903 = vpop.f32.mrf.mxu0
  %1904 = vdwg.mxu0
  %1909 = vrot.lane.b32.xlu0 %v223, 32
  %v1910 = vpop.permute.xlu0 %1909
  %1911 = vrot.lane.b32.xlu0 %v225, 32
  %v1912 = vpop.permute.xlu0 %1911
  %1913 = vrot.lane.b32.xlu0 %v229, 32
  %v1914 = vpop.permute.xlu0 %1913
  %1915 = vrot.lane.b32.xlu0 %v231, 32
  %v1916 = vpop.permute.xlu0 %1915
  %1917 = vrot.lane.b32.xlu0 %v235, 32
  %v1918 = vpop.permute.xlu0 %1917
  %1919 = vrot.lane.b32.xlu0 %v237, 32
  %v1920 = vpop.permute.xlu0 %1919
  %1921 = vrot.lane.b32.xlu0 %v241, 32
  %v1922 = vpop.permute.xlu0 %1921
  %1923 = vrot.lane.b32.xlu0 %v243, 32
  %v1924 = vpop.permute.xlu0 %1923
  %vm1925 = vcmask 261120
  %v1926 = vsel %vm1925, %v1910, %v1912
  %v1927 = vsel %vm1925, %v1914, %v1916
  %v1928 = vsel %vm1925, %v1918, %v1920
  %v1929 = vsel %vm1925, %v1922, %v1924
  %v1934 = vmul.f32 %v1747, %v1926
  %v1935 = vmul.f32 %v1752, %v1926
  %v1936 = vmul.f32 %v1757, %v1926
  %v1937 = vmul.f32 %v1762, %v1926
  %v1938 = vmul.f32 %v1767, %v1926
  %v1939 = vmul.f32 %v1772, %v1926
  %v1940 = vmul.f32 %v1777, %v1926
  %v1941 = vmul.f32 %v1782, %v1926
  %v1942 = vmul.f32 %v1787, %v1927
  %v1943 = vmul.f32 %v1792, %v1927
  %v1944 = vmul.f32 %v1797, %v1927
  %v1945 = vmul.f32 %v1802, %v1927
  %v1946 = vmul.f32 %v1807, %v1927
  %v1947 = vmul.f32 %v1812, %v1927
  %v1948 = vmul.f32 %v1817, %v1927
  %v1949 = vmul.f32 %v1822, %v1927
  %v1950 = vmul.f32 %v1827, %v1928
  %v1951 = vmul.f32 %v1832, %v1928
  %v1952 = vmul.f32 %v1837, %v1928
  %v1953 = vmul.f32 %v1842, %v1928
  %v1954 = vmul.f32 %v1847, %v1928
  %v1955 = vmul.f32 %v1852, %v1928
  %v1956 = vmul.f32 %v1857, %v1928
  %v1957 = vmul.f32 %v1862, %v1928
  %v1958 = vmul.f32 %v1867, %v1929
  %v1959 = vmul.f32 %v1872, %v1929
  %v1960 = vmul.f32 %v1877, %v1929
  %v1961 = vmul.f32 %v1882, %v1929
  %v1962 = vmul.f32 %v1887, %v1929
  %v1963 = vmul.f32 %v1892, %v1929
  %v1964 = vmul.f32 %v1897, %v1929
  %v1965 = vmul.f32 %v1902, %v1929
  %v1966 = vsel %vm649, %v1934, 0.0
  %v1967 = vrot.slane %v1966, 4
  %v1968 = vadd.f32 %v1966, %v1967
  %v1969 = vrot.slane %v1968, 2
  %v1970 = vadd.f32 %v1968, %v1969
  %v1971 = vrot.slane %v1970, 1
  %v1972 = vadd.f32 %v1970, %v1971
  %v1973 = vsel %vm649, %v1935, 0.0
  %v1974 = vrot.slane %v1973, 4
  %v1975 = vadd.f32 %v1973, %v1974
  %v1976 = vrot.slane %v1975, 2
  %v1977 = vadd.f32 %v1975, %v1976
  %v1978 = vrot.slane %v1977, 1
  %v1979 = vadd.f32 %v1977, %v1978
  %v1980 = vsel %vm649, %v1936, 0.0
  %v1981 = vrot.slane %v1980, 4
  %v1982 = vadd.f32 %v1980, %v1981
  %v1983 = vrot.slane %v1982, 2
  %v1984 = vadd.f32 %v1982, %v1983
  %v1985 = vrot.slane %v1984, 1
  %v1986 = vadd.f32 %v1984, %v1985
  %v1987 = vsel %vm649, %v1937, 0.0
  %v1988 = vrot.slane %v1987, 4
  %v1989 = vadd.f32 %v1987, %v1988
  %v1990 = vrot.slane %v1989, 2
  %v1991 = vadd.f32 %v1989, %v1990
  %v1992 = vrot.slane %v1991, 1
  %v1993 = vadd.f32 %v1991, %v1992
  %v1994 = vsel %vm649, %v1938, 0.0
  %v1995 = vrot.slane %v1994, 4
  %v1996 = vadd.f32 %v1994, %v1995
  %v1997 = vrot.slane %v1996, 2
  %v1998 = vadd.f32 %v1996, %v1997
  %v1999 = vrot.slane %v1998, 1
  %v2000 = vadd.f32 %v1998, %v1999
  %v2001 = vsel %vm649, %v1939, 0.0
  %v2002 = vrot.slane %v2001, 4
  %v2003 = vadd.f32 %v2001, %v2002
  %v2004 = vrot.slane %v2003, 2
  %v2005 = vadd.f32 %v2003, %v2004
  %v2006 = vrot.slane %v2005, 1
  %v2007 = vadd.f32 %v2005, %v2006
  %v2008 = vsel %vm649, %v1940, 0.0
  %v2009 = vrot.slane %v2008, 4
  %v2010 = vadd.f32 %v2008, %v2009
  %v2011 = vrot.slane %v2010, 2
  %v2012 = vadd.f32 %v2010, %v2011
  %v2013 = vrot.slane %v2012, 1
  %v2014 = vadd.f32 %v2012, %v2013
  %v2015 = vsel %vm649, %v1941, 0.0
  %v2016 = vrot.slane %v2015, 4
  %v2017 = vadd.f32 %v2015, %v2016
  %v2018 = vrot.slane %v2017, 2
  %v2019 = vadd.f32 %v2017, %v2018
  %v2020 = vrot.slane %v2019, 1
  %v2021 = vadd.f32 %v2019, %v2020
  %v2022 = vsel %vm649, %v1942, 0.0
  %v2023 = vrot.slane %v2022, 4
  %v2024 = vadd.f32 %v2022, %v2023
  %v2025 = vrot.slane %v2024, 2
  %v2026 = vadd.f32 %v2024, %v2025
  %v2027 = vrot.slane %v2026, 1
  %v2028 = vadd.f32 %v2026, %v2027
  %v2029 = vsel %vm649, %v1943, 0.0
  %v2030 = vrot.slane %v2029, 4
  %v2031 = vadd.f32 %v2029, %v2030
  %v2032 = vrot.slane %v2031, 2
  %v2033 = vadd.f32 %v2031, %v2032
  %v2034 = vrot.slane %v2033, 1
  %v2035 = vadd.f32 %v2033, %v2034
  %v2036 = vsel %vm649, %v1944, 0.0
  %v2037 = vrot.slane %v2036, 4
  %v2038 = vadd.f32 %v2036, %v2037
  %v2039 = vrot.slane %v2038, 2
  %v2040 = vadd.f32 %v2038, %v2039
  %v2041 = vrot.slane %v2040, 1
  %v2042 = vadd.f32 %v2040, %v2041
  %v2043 = vsel %vm649, %v1945, 0.0
  %v2044 = vrot.slane %v2043, 4
  %v2045 = vadd.f32 %v2043, %v2044
  %v2046 = vrot.slane %v2045, 2
  %v2047 = vadd.f32 %v2045, %v2046
  %v2048 = vrot.slane %v2047, 1
  %v2049 = vadd.f32 %v2047, %v2048
  %v2050 = vsel %vm649, %v1946, 0.0
  %v2051 = vrot.slane %v2050, 4
  %v2052 = vadd.f32 %v2050, %v2051
  %v2053 = vrot.slane %v2052, 2
  %v2054 = vadd.f32 %v2052, %v2053
  %v2055 = vrot.slane %v2054, 1
  %v2056 = vadd.f32 %v2054, %v2055
  %v2057 = vsel %vm649, %v1947, 0.0
  %v2058 = vrot.slane %v2057, 4
  %v2059 = vadd.f32 %v2057, %v2058
  %v2060 = vrot.slane %v2059, 2
  %v2061 = vadd.f32 %v2059, %v2060
  %v2062 = vrot.slane %v2061, 1
  %v2063 = vadd.f32 %v2061, %v2062
  %v2064 = vsel %vm649, %v1948, 0.0
  %v2065 = vrot.slane %v2064, 4
  %v2066 = vadd.f32 %v2064, %v2065
  %v2067 = vrot.slane %v2066, 2
  %v2068 = vadd.f32 %v2066, %v2067
  %v2069 = vrot.slane %v2068, 1
  %v2070 = vadd.f32 %v2068, %v2069
  %v2071 = vsel %vm649, %v1949, 0.0
  %v2072 = vrot.slane %v2071, 4
  %v2073 = vadd.f32 %v2071, %v2072
  %v2074 = vrot.slane %v2073, 2
  %v2075 = vadd.f32 %v2073, %v2074
  %v2076 = vrot.slane %v2075, 1
  %v2077 = vadd.f32 %v2075, %v2076
  %v2078 = vsel %vm649, %v1950, 0.0
  %v2079 = vrot.slane %v2078, 4
  %v2080 = vadd.f32 %v2078, %v2079
  %v2081 = vrot.slane %v2080, 2
  %v2082 = vadd.f32 %v2080, %v2081
  %v2083 = vrot.slane %v2082, 1
  %v2084 = vadd.f32 %v2082, %v2083
  %v2085 = vsel %vm649, %v1951, 0.0
  %v2086 = vrot.slane %v2085, 4
  %v2087 = vadd.f32 %v2085, %v2086
  %v2088 = vrot.slane %v2087, 2
  %v2089 = vadd.f32 %v2087, %v2088
  %v2090 = vrot.slane %v2089, 1
  %v2091 = vadd.f32 %v2089, %v2090
  %v2092 = vsel %vm649, %v1952, 0.0
  %v2093 = vrot.slane %v2092, 4
  %v2094 = vadd.f32 %v2092, %v2093
  %v2095 = vrot.slane %v2094, 2
  %v2096 = vadd.f32 %v2094, %v2095
  %v2097 = vrot.slane %v2096, 1
  %v2098 = vadd.f32 %v2096, %v2097
  %v2099 = vsel %vm649, %v1953, 0.0
  %v2100 = vrot.slane %v2099, 4
  %v2101 = vadd.f32 %v2099, %v2100
  %v2102 = vrot.slane %v2101, 2
  %v2103 = vadd.f32 %v2101, %v2102
  %v2104 = vrot.slane %v2103, 1
  %v2105 = vadd.f32 %v2103, %v2104
  %v2106 = vsel %vm649, %v1954, 0.0
  %v2107 = vrot.slane %v2106, 4
  %v2108 = vadd.f32 %v2106, %v2107
  %v2109 = vrot.slane %v2108, 2
  %v2110 = vadd.f32 %v2108, %v2109
  %v2111 = vrot.slane %v2110, 1
  %v2112 = vadd.f32 %v2110, %v2111
  %v2113 = vsel %vm649, %v1955, 0.0
  %v2114 = vrot.slane %v2113, 4
  %v2115 = vadd.f32 %v2113, %v2114
  %v2116 = vrot.slane %v2115, 2
  %v2117 = vadd.f32 %v2115, %v2116
  %v2118 = vrot.slane %v2117, 1
  %v2119 = vadd.f32 %v2117, %v2118
  %v2120 = vsel %vm649, %v1956, 0.0
  %v2121 = vrot.slane %v2120, 4
  %v2122 = vadd.f32 %v2120, %v2121
  %v2123 = vrot.slane %v2122, 2
  %v2124 = vadd.f32 %v2122, %v2123
  %v2125 = vrot.slane %v2124, 1
  %v2126 = vadd.f32 %v2124, %v2125
  %v2127 = vsel %vm649, %v1957, 0.0
  %v2128 = vrot.slane %v2127, 4
  %v2129 = vadd.f32 %v2127, %v2128
  %v2130 = vrot.slane %v2129, 2
  %v2131 = vadd.f32 %v2129, %v2130
  %v2132 = vrot.slane %v2131, 1
  %v2133 = vadd.f32 %v2131, %v2132
  %v2134 = vsel %vm649, %v1958, 0.0
  %v2135 = vrot.slane %v2134, 4
  %v2136 = vadd.f32 %v2134, %v2135
  %v2137 = vrot.slane %v2136, 2
  %v2138 = vadd.f32 %v2136, %v2137
  %v2139 = vrot.slane %v2138, 1
  %v2140 = vadd.f32 %v2138, %v2139
  %v2141 = vsel %vm649, %v1959, 0.0
  %v2142 = vrot.slane %v2141, 4
  %v2143 = vadd.f32 %v2141, %v2142
  %v2144 = vrot.slane %v2143, 2
  %v2145 = vadd.f32 %v2143, %v2144
  %v2146 = vrot.slane %v2145, 1
  %v2147 = vadd.f32 %v2145, %v2146
  %v2148 = vsel %vm649, %v1960, 0.0
  %v2149 = vrot.slane %v2148, 4
  %v2150 = vadd.f32 %v2148, %v2149
  %v2151 = vrot.slane %v2150, 2
  %v2152 = vadd.f32 %v2150, %v2151
  %v2153 = vrot.slane %v2152, 1
  %v2154 = vadd.f32 %v2152, %v2153
  %v2155 = vsel %vm649, %v1961, 0.0
  %v2156 = vrot.slane %v2155, 4
  %v2157 = vadd.f32 %v2155, %v2156
  %v2158 = vrot.slane %v2157, 2
  %v2159 = vadd.f32 %v2157, %v2158
  %v2160 = vrot.slane %v2159, 1
  %v2161 = vadd.f32 %v2159, %v2160
  %v2162 = vsel %vm649, %v1962, 0.0
  %v2163 = vrot.slane %v2162, 4
  %v2164 = vadd.f32 %v2162, %v2163
  %v2165 = vrot.slane %v2164, 2
  %v2166 = vadd.f32 %v2164, %v2165
  %v2167 = vrot.slane %v2166, 1
  %v2168 = vadd.f32 %v2166, %v2167
  %v2169 = vsel %vm649, %v1963, 0.0
  %v2170 = vrot.slane %v2169, 4
  %v2171 = vadd.f32 %v2169, %v2170
  %v2172 = vrot.slane %v2171, 2
  %v2173 = vadd.f32 %v2171, %v2172
  %v2174 = vrot.slane %v2173, 1
  %v2175 = vadd.f32 %v2173, %v2174
  %v2176 = vsel %vm649, %v1964, 0.0
  %v2177 = vrot.slane %v2176, 4
  %v2178 = vadd.f32 %v2176, %v2177
  %v2179 = vrot.slane %v2178, 2
  %v2180 = vadd.f32 %v2178, %v2179
  %v2181 = vrot.slane %v2180, 1
  %v2182 = vadd.f32 %v2180, %v2181
  %v2183 = vsel %vm649, %v1965, 0.0
  %v2184 = vrot.slane %v2183, 4
  %v2185 = vadd.f32 %v2183, %v2184
  %v2186 = vrot.slane %v2185, 2
  %v2187 = vadd.f32 %v2185, %v2186
  %v2188 = vrot.slane %v2187, 1
  %v2189 = vadd.f32 %v2187, %v2188
  %vm2222 = vcmask 1041409
  %v2223 = vsel %vm2222, %v1979, %v1972
  %vm2224 = vcmask 1042434
  %v2225 = vsel %vm2224, %v1986, %v2223
  %vm2226 = vcmask 1043459
  %v2227 = vsel %vm2226, %v1993, %v2225
  %vm2228 = vcmask 1044484
  %v2229 = vsel %vm2228, %v2000, %v2227
  %vm2230 = vcmask 1045509
  %v2231 = vsel %vm2230, %v2007, %v2229
  %vm2232 = vcmask 1046534
  %v2233 = vsel %vm2232, %v2014, %v2231
  %vm2234 = vcmask 1047559
  %v2235 = vsel %vm2234, %v2021, %v2233
  %v2236 = vsel %vm2222, %v2035, %v2028
  %v2237 = vsel %vm2224, %v2042, %v2236
  %v2238 = vsel %vm2226, %v2049, %v2237
  %v2239 = vsel %vm2228, %v2056, %v2238
  %v2240 = vsel %vm2230, %v2063, %v2239
  %v2241 = vsel %vm2232, %v2070, %v2240
  %v2242 = vsel %vm2234, %v2077, %v2241
  %v2243 = vsel %vm2222, %v2091, %v2084
  %v2244 = vsel %vm2224, %v2098, %v2243
  %v2245 = vsel %vm2226, %v2105, %v2244
  %v2246 = vsel %vm2228, %v2112, %v2245
  %v2247 = vsel %vm2230, %v2119, %v2246
  %v2248 = vsel %vm2232, %v2126, %v2247
  %v2249 = vsel %vm2234, %v2133, %v2248
  %v2250 = vsel %vm2222, %v2147, %v2140
  %v2251 = vsel %vm2224, %v2154, %v2250
  %v2252 = vsel %vm2226, %v2161, %v2251
  %v2253 = vsel %vm2228, %v2168, %v2252
  %v2254 = vsel %vm2230, %v2175, %v2253
  %v2255 = vsel %vm2232, %v2182, %v2254
  %v2256 = vsel %vm2234, %v2189, %v2255
  %v2257 = vsel %vm649, %v2235, 0
  %v2259 = vsel %vm649, %v2242, 0
  %v2261 = vsel %vm649, %v2249, 0
  %v2263 = vsel %vm649, %v2256, 0
  %2265 = vmatprep.subr.mxu0 0.0
  %2266 = vmatpush1.msra.mxu0 0.0
  %2267 = vmatprep.subr.mxu0 0.0
  %2268 = vmatpush1.msra.mxu0 0.0
  %2269 = vmatprep.subr.mxu0 0.0
  %2270 = vmatpush1.msra.mxu0 0.0
  %2271 = vmatprep.subr.mxu0 0.0
  %2272 = vmatpush1.msra.mxu0 0.0
  %2273 = vmatprep.subr.mxu0 0.0
  %2274 = vmatpush1.msra.mxu0 0.0
  %2275 = vmatprep.subr.mxu0 0.0
  %2276 = vmatpush1.msra.mxu0 0.0
  %2277 = vmatprep.subr.mxu0 0.0
  %2278 = vmatpush1.msra.mxu0 0.0
  %2279 = vmatprep.subr.mxu0 0.0
  %2280 = vmatpush1.msra.mxu0 0.0
  %2281 = vmatprep.subr.mxu0 0.0
  %2282 = vmatpush1.msra.mxu0 0.0
  %2283 = vmatprep.subr.mxu0 0.0
  %2284 = vmatpush1.msra.mxu0 0.0
  %2285 = vmatprep.subr.mxu0 0.0
  %2286 = vmatpush1.msra.mxu0 %v62
  %2287 = vmatprep.subr.mxu0 0.0
  %2288 = vmatpush1.msra.mxu0 %v61
  %2289 = vmatprep.subr.mxu0 0.0
  %2290 = vmatpush1.msra.mxu0 %v60
  %2291 = vmatprep.subr.mxu0 0.0
  %2292 = vmatpush1.msra.mxu0 %v59
  %2293 = vmatprep.subr.mxu0 0.0
  %2294 = vmatpush1.msra.mxu0 %v58
  %2295 = vmatprep.subr.mxu0 0.0
  %2296 = vmatpush1.msra.mxu0 %v57
  %2297 = vmatprep.subr.mxu0 0.0
  %2298 = vmatpush2.msra.mxu0 0.0
  %2299 = vmatprep.subr.mxu0 0.0
  %2300 = vmatpush2.msra.mxu0 0.0
  %2301 = vmatprep.subr.mxu0 0.0
  %2302 = vmatpush2.msra.mxu0 0.0
  %2303 = vmatprep.subr.mxu0 0.0
  %2304 = vmatpush2.msra.mxu0 0.0
  %2305 = vmatprep.subr.mxu0 0.0
  %2306 = vmatpush2.msra.mxu0 0.0
  %2307 = vmatprep.subr.mxu0 0.0
  %2308 = vmatpush2.msra.mxu0 0.0
  %2309 = vmatprep.subr.mxu0 0.0
  %2310 = vmatpush2.msra.mxu0 0.0
  %2311 = vmatprep.subr.mxu0 0.0
  %2312 = vmatpush2.msra.mxu0 0.0
  %2313 = vmatprep.subr.mxu0 0.0
  %2314 = vmatpush2.msra.mxu0 0.0
  %2315 = vmatprep.subr.mxu0 0.0
  %2316 = vmatpush2.msra.mxu0 0.0
  %2317 = vmatprep.subr.mxu0 0.0
  %2318 = vmatpush2.msra.mxu0 0.0
  %2319 = vmatprep.subr.mxu0 0.0
  %2320 = vmatpush2.msra.mxu0 0.0
  %2321 = vmatprep.subr.mxu0 0.0
  %2322 = vmatpush2.msra.mxu0 0.0
  %2323 = vmatprep.subr.mxu0 0.0
  %2324 = vmatpush2.msra.mxu0 0.0
  %2325 = vmatprep.subr.mxu0 0.0
  %2326 = vmatpush2.msra.mxu0 0.0
  %2327 = vmatprep.subr.mxu0 0.0
  %2328 = vmatpush2.msra.mxu0 0.0
  %2329 = vmatprep.mubr.f32.mxu0 0.0
  %2330 = vmatmul.mubr.f32.gmra.mxu0 %v2257
  %v2331 = vpop.f32.mrf.mxu0
  %v2332 = vadd.f32 %v53, %v2331
  %v2333 = vpop.f32.mrf.mxu0
  %2334 = vmatprep.mubr.f32.mxu0 0.0
  %2335 = vmatmul.mubr.f32.gmra.mxu0 %v2259
  %v2336 = vpop.f32.mrf.mxu0
  %v2337 = vadd.f32 %v53, %v2336
  %v2338 = vpop.f32.mrf.mxu0
  %2339 = vmatprep.mubr.f32.mxu0 0.0
  %2340 = vmatmul.mubr.f32.gmra.mxu0 %v2261
  %v2341 = vpop.f32.mrf.mxu0
  %v2342 = vadd.f32 %v53, %v2341
  %v2343 = vpop.f32.mrf.mxu0
  %2344 = vmatprep.mubr.f32.mxu0 0.0
  %2345 = vmatmul.mubr.f32.gmra.mxu0 %v2263
  %v2346 = vpop.f32.mrf.mxu0
  %v2347 = vadd.f32 %v53, %v2346
  %v2348 = vpop.f32.mrf.mxu0
  %2349 = vdwg.mxu0
  %v2350 = vadd.f32 %v11, %v2332
  %v2351 = vadd.f32 %v12, %v2337
  %v2352 = vadd.f32 %v13, %v2342
  %v2353 = vadd.f32 %v14, %v2347
  %2354 = vadd.xlane.f32.xlu0 %v2350
  %v2355 = vpop.xlane.xlu0 %2354
  %2356 = vadd.xlane.f32.xlu0 %v2351
  %v2357 = vpop.xlane.xlu0 %2356
  %2358 = vadd.xlane.f32.xlu0 %v2352
  %v2359 = vpop.xlane.xlu0 %2358
  %2360 = vadd.xlane.f32.xlu0 %v2353
  %v2361 = vpop.xlane.xlu0 %2360
  %v2362 = vmul.f32 %v2355, 0.020833334
  %v2363 = vmul.f32 %v2357, 0.020833334
  %v2364 = vmul.f32 %v2359, 0.020833334
  %v2365 = vmul.f32 %v2361, 0.020833334
  %v2366 = vsub.f32 %v2350, %v2362
  %v2367 = vsub.f32 %v2351, %v2363
  %v2368 = vsub.f32 %v2352, %v2364
  %v2369 = vsub.f32 %v2353, %v2365
  %v2370 = vmul.f32 %v2366, %v56
  %v2371 = vmul.f32 %v2367, %v56
  %v2372 = vmul.f32 %v2368, %v56
  %v2373 = vmul.f32 %v2369, %v56
  %v2374 = vmul.f32 %v2370, %v2370
  %v2375 = vmul.f32 %v2371, %v2371
  %v2376 = vmul.f32 %v2372, %v2372
  %v2377 = vmul.f32 %v2373, %v2373
  %2378 = vadd.xlane.f32.xlu0 %v2374
  %v2379 = vpop.xlane.xlu0 %2378
  %2380 = vadd.xlane.f32.xlu0 %v2375
  %v2381 = vpop.xlane.xlu0 %2380
  %2382 = vadd.xlane.f32.xlu0 %v2376
  %v2383 = vpop.xlane.xlu0 %2382
  %2384 = vadd.xlane.f32.xlu0 %v2377
  %v2385 = vpop.xlane.xlu0 %2384
  %v2386 = vmul.f32 %v2379, 0.020833334
  %v2387 = vmul.f32 %v2381, 0.020833334
  %v2388 = vmul.f32 %v2383, 0.020833334
  %v2389 = vmul.f32 %v2385, 0.020833334
  %v2390 = vadd.f32 %v2386, 1e-05
  %v2391 = vadd.f32 %v2387, 1e-05
  %v2392 = vadd.f32 %v2388, 1e-05
  %v2393 = vadd.f32 %v2389, 1e-05
  %v2394 = vrsqrt.pop %v2390
  %v2395 = vrsqrt.pop %v2391
  %v2396 = vrsqrt.pop %v2392
  %v2397 = vrsqrt.pop %v2393
  %v2398 = vmul.f32 %v2370, %v2394
  %v2399 = vmul.f32 %v2371, %v2395
  %v2400 = vmul.f32 %v2372, %v2396
  %v2401 = vmul.f32 %v2373, %v2397
  %v2402 = vmul.f32 %v2398, %v51
  %v2403 = vmul.f32 %v2399, %v51
  %v2404 = vmul.f32 %v2400, %v51
  %v2405 = vmul.f32 %v2401, %v51
  %v2406 = vadd.f32 %v2402, %v52
  %v2407 = vadd.f32 %v2403, %v52
  %v2408 = vadd.f32 %v2404, %v52
  %v2409 = vadd.f32 %v2405, %v52
  %2410 = vmatprep.subr.mxu0 0.0
  %2411 = vmatpush1.msra.mxu0 %v78
  %2412 = vmatprep.subr.mxu0 0.0
  %2413 = vmatpush1.msra.mxu0 %v77
  %2414 = vmatprep.subr.mxu0 0.0
  %2415 = vmatpush1.msra.mxu0 %v76
  %2416 = vmatprep.subr.mxu0 0.0
  %2417 = vmatpush1.msra.mxu0 %v75
  %2418 = vmatprep.subr.mxu0 0.0
  %2419 = vmatpush1.msra.mxu0 %v74
  %2420 = vmatprep.subr.mxu0 0.0
  %2421 = vmatpush1.msra.mxu0 %v73
  %2422 = vmatprep.subr.mxu0 0.0
  %2423 = vmatpush1.msra.mxu0 %v72
  %2424 = vmatprep.subr.mxu0 0.0
  %2425 = vmatpush1.msra.mxu0 %v71
  %2426 = vmatprep.subr.mxu0 0.0
  %2427 = vmatpush1.msra.mxu0 %v70
  %2428 = vmatprep.subr.mxu0 0.0
  %2429 = vmatpush1.msra.mxu0 %v69
  %2430 = vmatprep.subr.mxu0 0.0
  %2431 = vmatpush1.msra.mxu0 %v68
  %2432 = vmatprep.subr.mxu0 0.0
  %2433 = vmatpush1.msra.mxu0 %v67
  %2434 = vmatprep.subr.mxu0 0.0
  %2435 = vmatpush1.msra.mxu0 %v66
  %2436 = vmatprep.subr.mxu0 0.0
  %2437 = vmatpush1.msra.mxu0 %v65
  %2438 = vmatprep.subr.mxu0 0.0
  %2439 = vmatpush1.msra.mxu0 %v64
  %2440 = vmatprep.subr.mxu0 0.0
  %2441 = vmatpush1.msra.mxu0 %v63
  %2442 = vmatprep.subr.mxu0 0.0
  %2443 = vmatpush2.msra.mxu0 0.0
  %2444 = vmatprep.subr.mxu0 0.0
  %2445 = vmatpush2.msra.mxu0 0.0
  %2446 = vmatprep.subr.mxu0 0.0
  %2447 = vmatpush2.msra.mxu0 0.0
  %2448 = vmatprep.subr.mxu0 0.0
  %2449 = vmatpush2.msra.mxu0 0.0
  %2450 = vmatprep.subr.mxu0 0.0
  %2451 = vmatpush2.msra.mxu0 0.0
  %2452 = vmatprep.subr.mxu0 0.0
  %2453 = vmatpush2.msra.mxu0 0.0
  %2454 = vmatprep.subr.mxu0 0.0
  %2455 = vmatpush2.msra.mxu0 0.0
  %2456 = vmatprep.subr.mxu0 0.0
  %2457 = vmatpush2.msra.mxu0 0.0
  %2458 = vmatprep.subr.mxu0 0.0
  %2459 = vmatpush2.msra.mxu0 0.0
  %2460 = vmatprep.subr.mxu0 0.0
  %2461 = vmatpush2.msra.mxu0 0.0
  %2462 = vmatprep.subr.mxu0 0.0
  %2463 = vmatpush2.msra.mxu0 0.0
  %2464 = vmatprep.subr.mxu0 0.0
  %2465 = vmatpush2.msra.mxu0 0.0
  %2466 = vmatprep.subr.mxu0 0.0
  %2467 = vmatpush2.msra.mxu0 0.0
  %2468 = vmatprep.subr.mxu0 0.0
  %2469 = vmatpush2.msra.mxu0 0.0
  %2470 = vmatprep.subr.mxu0 0.0
  %2471 = vmatpush2.msra.mxu0 0.0
  %2472 = vmatprep.subr.mxu0 0.0
  %2473 = vmatpush2.msra.mxu0 0.0
  %2474 = vmatprep.mubr.f32.mxu0 0.0
  %2475 = vmatmul.mubr.f32.gmra.mxu0 %v2406
  %v2476 = vpop.f32.mrf.mxu0
  %v2477 = vadd.f32 %v55, %v2476
  %v2478 = vpop.f32.mrf.mxu0
  %2479 = vmatprep.mubr.f32.mxu0 0.0
  %2480 = vmatmul.mubr.f32.gmra.mxu0 %v2407
  %v2481 = vpop.f32.mrf.mxu0
  %v2482 = vadd.f32 %v55, %v2481
  %v2483 = vpop.f32.mrf.mxu0
  %2484 = vmatprep.mubr.f32.mxu0 0.0
  %2485 = vmatmul.mubr.f32.gmra.mxu0 %v2408
  %v2486 = vpop.f32.mrf.mxu0
  %v2487 = vadd.f32 %v55, %v2486
  %v2488 = vpop.f32.mrf.mxu0
  %2489 = vmatprep.mubr.f32.mxu0 0.0
  %2490 = vmatmul.mubr.f32.gmra.mxu0 %v2409
  %v2491 = vpop.f32.mrf.mxu0
  %v2492 = vadd.f32 %v55, %v2491
  %v2493 = vpop.f32.mrf.mxu0
  %2494 = vdwg.mxu0
  %v2495 = vmul.f32 %v2477, %v2477
  %v2496 = vmul.f32 %v2482, %v2482
  %v2497 = vmul.f32 %v2487, %v2487
  %v2498 = vmul.f32 %v2492, %v2492
  %v2499 = vmul.f32 %v2477, %v2495
  %v2500 = vmul.f32 %v2482, %v2496
  %v2501 = vmul.f32 %v2487, %v2497
  %v2502 = vmul.f32 %v2492, %v2498
  %v2503 = vmul.f32 %v2499, 0.044715
  %v2504 = vmul.f32 %v2500, 0.044715
  %v2505 = vmul.f32 %v2501, 0.044715
  %v2506 = vmul.f32 %v2502, 0.044715
  %v2507 = vadd.f32 %v2477, %v2503
  %v2508 = vadd.f32 %v2482, %v2504
  %v2509 = vadd.f32 %v2487, %v2505
  %v2510 = vadd.f32 %v2492, %v2506
  %v2511 = vmul.f32 %v2507, 0.7978846
  %v2512 = vmul.f32 %v2508, 0.7978846
  %v2513 = vmul.f32 %v2509, 0.7978846
  %v2514 = vmul.f32 %v2510, 0.7978846
  %v2515 = vtanh.pop %v2511
  %v2516 = vtanh.pop %v2512
  %v2517 = vtanh.pop %v2513
  %v2518 = vtanh.pop %v2514
  %v2519 = vadd.f32 %v2515, 1.0
  %v2520 = vadd.f32 %v2516, 1.0
  %v2521 = vadd.f32 %v2517, 1.0
  %v2522 = vadd.f32 %v2518, 1.0
  %v2523 = vmul.f32 %v2519, 0.5
  %v2524 = vmul.f32 %v2520, 0.5
  %v2525 = vmul.f32 %v2521, 0.5
  %v2526 = vmul.f32 %v2522, 0.5
  %v2527 = vmul.f32 %v2477, %v2523
  %v2528 = vmul.f32 %v2482, %v2524
  %v2529 = vmul.f32 %v2487, %v2525
  %v2530 = vmul.f32 %v2492, %v2526
  %vm2531 = vcmask 130048
  %v2533 = vsel %vm2531, %v2527, 0
  %v2536 = vsel %vm2531, %v2528, 0
  %v2539 = vsel %vm2531, %v2529, 0
  %v2542 = vsel %vm2531, %v2530, 0
  %2544 = vmatprep.subr.mxu0 0.0
  %2545 = vmatpush1.msra.mxu0 0.0
  %2546 = vmatprep.subr.mxu0 0.0
  %2547 = vmatpush1.msra.mxu0 0.0
  %2548 = vmatprep.subr.mxu0 0.0
  %2549 = vmatpush1.msra.mxu0 0.0
  %2550 = vmatprep.subr.mxu0 0.0
  %2551 = vmatpush1.msra.mxu0 0.0
  %2552 = vmatprep.subr.mxu0 0.0
  %2553 = vmatpush1.msra.mxu0 0.0
  %2554 = vmatprep.subr.mxu0 0.0
  %2555 = vmatpush1.msra.mxu0 0.0
  %2556 = vmatprep.subr.mxu0 0.0
  %2557 = vmatpush1.msra.mxu0 0.0
  %2558 = vmatprep.subr.mxu0 0.0
  %2559 = vmatpush1.msra.mxu0 0.0
  %2560 = vmatprep.subr.mxu0 0.0
  %2561 = vmatpush1.msra.mxu0 0.0
  %2562 = vmatprep.subr.mxu0 0.0
  %2563 = vmatpush1.msra.mxu0 0.0
  %2564 = vmatprep.subr.mxu0 0.0
  %2565 = vmatpush1.msra.mxu0 0.0
  %2566 = vmatprep.subr.mxu0 0.0
  %2567 = vmatpush1.msra.mxu0 0.0
  %2568 = vmatprep.subr.mxu0 0.0
  %2569 = vmatpush1.msra.mxu0 0.0
  %2570 = vmatprep.subr.mxu0 0.0
  %2571 = vmatpush1.msra.mxu0 0.0
  %2572 = vmatprep.subr.mxu0 0.0
  %2573 = vmatpush1.msra.mxu0 %v80
  %2574 = vmatprep.subr.mxu0 0.0
  %2575 = vmatpush1.msra.mxu0 %v79
  %2576 = vmatprep.subr.mxu0 0.0
  %2577 = vmatpush2.msra.mxu0 0.0
  %2578 = vmatprep.subr.mxu0 0.0
  %2579 = vmatpush2.msra.mxu0 0.0
  %2580 = vmatprep.subr.mxu0 0.0
  %2581 = vmatpush2.msra.mxu0 0.0
  %2582 = vmatprep.subr.mxu0 0.0
  %2583 = vmatpush2.msra.mxu0 0.0
  %2584 = vmatprep.subr.mxu0 0.0
  %2585 = vmatpush2.msra.mxu0 0.0
  %2586 = vmatprep.subr.mxu0 0.0
  %2587 = vmatpush2.msra.mxu0 0.0
  %2588 = vmatprep.subr.mxu0 0.0
  %2589 = vmatpush2.msra.mxu0 0.0
  %2590 = vmatprep.subr.mxu0 0.0
  %2591 = vmatpush2.msra.mxu0 0.0
  %2592 = vmatprep.subr.mxu0 0.0
  %2593 = vmatpush2.msra.mxu0 0.0
  %2594 = vmatprep.subr.mxu0 0.0
  %2595 = vmatpush2.msra.mxu0 0.0
  %2596 = vmatprep.subr.mxu0 0.0
  %2597 = vmatpush2.msra.mxu0 0.0
  %2598 = vmatprep.subr.mxu0 0.0
  %2599 = vmatpush2.msra.mxu0 0.0
  %2600 = vmatprep.subr.mxu0 0.0
  %2601 = vmatpush2.msra.mxu0 0.0
  %2602 = vmatprep.subr.mxu0 0.0
  %2603 = vmatpush2.msra.mxu0 0.0
  %2604 = vmatprep.subr.mxu0 0.0
  %2605 = vmatpush2.msra.mxu0 0.0
  %2606 = vmatprep.subr.mxu0 0.0
  %2607 = vmatpush2.msra.mxu0 0.0
  %2608 = vmatprep.mubr.f32.mxu0 0.0
  %2609 = vmatmul.mubr.f32.gmra.mxu0 %v2533
  %v2610 = vpop.f32.mrf.mxu0
  %v2611 = vadd.f32 %v54, %v2610
  %v2612 = vpop.f32.mrf.mxu0
  %2613 = vmatprep.mubr.f32.mxu0 0.0
  %2614 = vmatmul.mubr.f32.gmra.mxu0 %v2536
  %v2615 = vpop.f32.mrf.mxu0
  %v2616 = vadd.f32 %v54, %v2615
  %v2617 = vpop.f32.mrf.mxu0
  %2618 = vmatprep.mubr.f32.mxu0 0.0
  %2619 = vmatmul.mubr.f32.gmra.mxu0 %v2539
  %v2620 = vpop.f32.mrf.mxu0
  %v2621 = vadd.f32 %v54, %v2620
  %v2622 = vpop.f32.mrf.mxu0
  %2623 = vmatprep.mubr.f32.mxu0 0.0
  %2624 = vmatmul.mubr.f32.gmra.mxu0 %v2542
  %v2625 = vpop.f32.mrf.mxu0
  %v2626 = vadd.f32 %v54, %v2625
  %v2627 = vpop.f32.mrf.mxu0
  %2628 = vdwg.mxu0
  %v2629 = vadd.f32 %v2350, %v2611
  %v2630 = vadd.f32 %v2351, %v2616
  %v2631 = vadd.f32 %v2352, %v2621
  %v2632 = vadd.f32 %v2353, %v2626
  %2633 = vst [vmem:[%s2] sm:$0xff] %v2629
  %2634 = vst [vmem:[%s2 + $0x8] sm:$0xff] %v2630
  %2635 = vst [vmem:[%s2 + $0x10] sm:$0xff] %v2631
  %2636 = vst [vmem:[%s2 + $0x18] sm:$0xff] %v2632
  // Predicated region
  $region10: #{block_forward.1} parent=0 // pred_check
    _
  $region11: #{block_forward.1} parent=0 // pred_check_branch
    %2638 = sbr.rel (0) target = $region13
  $region12: #{block_forward.1} parent=0 // pred_region
    _
  $region13: #{block_forward.1} parent=0 // pred_fallthru
    _
  // Predicated region
  $region14: #{block_forward.1} parent=0 // pred_check
    _
  $region15: #{block_forward.1} parent=0 // pred_check_branch
    %2640 = sbr.rel (0) target = $region17
  $region16: #{block_forward.1} parent=0 // pred_region
    _
  $region17: #{block_forward.1} parent=0 // pred_fallthru
    _

</llo_original>
